<compile_context>
chip_gen: v7x
topology: tpu7x:2x2x1
jax: 0.10.0
libtpu: 0.0.40
codegen_flags: <defaults>
</compile_context>

<pallas_src>
from functools import partial

import jax
import jax.numpy as jnp
from jax.experimental import pallas as pl
from jax.experimental.pallas import tpu as pltpu

LANE = 128      # lane width (hardware)
_GROUP = 16     # rows per accumulation group (1 packed bf16 vreg / 2 f32 vregs)
_NPART = 4      # independent partials per loss term (breaks the add chain)


def _detect_hw():
    """Pick NUM_CORES / TILE_R per generation.

    v7x: 2 TensorCores share 3.2 TB/s HBM -> CORE_PARALLEL leading axis and a
    big tile (the ~0.35us/step pipeline overhead is visible at that BW).
    v5e/v6e: single TensorCore, 512-row tiles are already ~85% of roofline and
    stay well inside v5e's 16 MiB default scoped VMEM.
    """
    kind = ""
    try:
        kind = jax.devices()[0].device_kind.lower()
    except Exception:
        pass
    is_v7 = ("v7" in kind) or ("7x" in kind)
    num_cores = 2 if is_v7 else 1
    tile_r = 2048 if is_v7 else 512
    return num_cores, tile_r


NUM_CORES, TILE_R = _detect_hw()
ROW_CHUNK = NUM_CORES * TILE_R          # row-count granularity of packed slabs
_CORE_PARALLEL = getattr(pltpu, "CORE_PARALLEL", "parallel")
_ARBITRARY = getattr(pltpu, "ARBITRARY", "arbitrary")


# ----------------------------------------------------------------------------
# Kernels
# ----------------------------------------------------------------------------
def _make_loss_kernel(n_terms, red_axis, scalar_out):
    """For each term t: accumulate sum( w_t * (p - m_t)^2 ) across the
    reduction grid axis.

    Per grid step, 16-row groups are streamed and accumulated into _NPART
    register-resident (16,128) partials per term (persisted across steps via a
    small VMEM scratch) -> no (TILE_R,128) scratch read-modify-write and no
    long serial add chain.  On the last step the partials are folded and
    either fully reduced to a scalar (SMEM output, single-core path) or
    written as a per-core (16,128) block (multi-core path).
    """
    groups = TILE_R // _GROUP

    def kernel(*refs):
        p_ref = refs[0]
        w_refs = refs[1:1 + n_terms]
        m_refs = refs[1 + n_terms:1 + 2 * n_terms]
        out_refs = refs[1 + 2 * n_terms:1 + 3 * n_terms]
        acc_refs = refs[1 + 3 * n_terms:1 + 4 * n_terms]

        step = pl.program_id(red_axis)

        @pl.when(step == 0)
        def _():
            for a in acc_refs:
                a[...] = jnp.zeros_like(a)

        # Load running partials (kept in vregs within the step).
        parts = [[acc_refs[t][s * _GROUP:(s + 1) * _GROUP, :]
                  for s in range(_NPART)] for t in range(n_terms)]

        for g in range(groups):
            r0 = g * _GROUP
            slot = g % _NPART
            p = p_ref[r0:r0 + _GROUP, :].astype(jnp.float32)
            for t in range(n_terms):
                d = p - m_refs[t][r0:r0 + _GROUP, :].astype(jnp.float32)
                w = w_refs[t][r0:r0 + _GROUP, :].astype(jnp.float32)
                parts[t][slot] = parts[t][slot] + w * d * d

        for t in range(n_terms):
            for s in range(_NPART):
                acc_refs[t][s * _GROUP:(s + 1) * _GROUP, :] = parts[t][s]

        @pl.when(step == pl.num_programs(red_axis) - 1)
        def _():
            for t in range(n_terms):
                tot = parts[t][0]
                for s in range(1, _NPART):
                    tot = tot + parts[t][s]
                if scalar_out:
                    # Finish the reduction in-kernel (XLU slot is idle here).
                    out_refs[t][0, 0] = jnp.sum(tot)
                else:
                    out_refs[t][...] = tot

    return kernel


def _omega_update_kernel(w_ref, p_ref, prev_ref, omega_ref, eps_ref, out_ref):
    """omega_new = omega + W / ((p - p_prev)^2 + epsilon), elementwise."""
    eps = eps_ref[0]
    d = p_ref[...].astype(jnp.float32) - prev_ref[...].astype(jnp.float32)
    new = (omega_ref[...].astype(jnp.float32)
           + w_ref[...].astype(jnp.float32) / (d * d + eps))
    out_ref[...] = new.astype(out_ref.dtype)


# ----------------------------------------------------------------------------
# Slab-level pallas_call wrappers
# ----------------------------------------------------------------------------
@jax.jit
def _weighted_sq_diff_sums(p2d, weights, means):
    """sum(w_t * (p - m_t)^2) for every (w_t, m_t) pair, sharing a single
    streaming pass over the params slab.  All slabs must be pre-packed
    (R, 128) with R % (NUM_CORES * TILE_R) == 0 (see pack_params)."""
    n_terms = len(weights)
    R, C = p2d.shape
    assert C == LANE and R % ROW_CHUNK == 0, (R, C)
    for s in tuple(weights) + tuple(means):
        assert s.shape == (R, LANE), s.shape
    blocks = R // TILE_R

    if NUM_CORES == 1:
        grid = (blocks,)
        stream = pl.BlockSpec((TILE_R, LANE), lambda i: (i, 0))
        out_specs = [pl.BlockSpec(memory_space=pltpu.MemorySpace.SMEM)
                     for _ in range(n_terms)]
        out_shape = tuple(jax.ShapeDtypeStruct((1, 1), jnp.float32)
                          for _ in range(n_terms))
        semantics = ("arbitrary",)
        red_axis, scalar_out = 0, True
    else:
        bpc = blocks // NUM_CORES
        grid = (NUM_CORES, bpc)
        stream = pl.BlockSpec((TILE_R, LANE), lambda c, i: (c * bpc + i, 0))
        out_specs = [pl.BlockSpec((_GROUP, LANE), lambda c, i: (c, 0))
                     for _ in range(n_terms)]
        out_shape = tuple(jax.ShapeDtypeStruct((NUM_CORES * _GROUP, LANE),
                                               jnp.float32)
                          for _ in range(n_terms))
        semantics = (_CORE_PARALLEL, _ARBITRARY)
        red_axis, scalar_out = 1, False

    outs = pl.pallas_call(
        _make_loss_kernel(n_terms, red_axis, scalar_out),
        out_shape=out_shape,
        grid_spec=pltpu.PrefetchScalarGridSpec(
            num_scalar_prefetch=0,
            grid=grid,
            in_specs=[stream] * (1 + 2 * n_terms),
            out_specs=out_specs,
            scratch_shapes=[pltpu.VMEM((_NPART * _GROUP, LANE), jnp.float32)
                            for _ in range(n_terms)],
        ),
        compiler_params=pltpu.CompilerParams(dimension_semantics=semantics),
    )(p2d, *weights, *means)

    if not isinstance(outs, (list, tuple)):
        outs = (outs,)
    # Single-core path: (1,1) scalar already reduced in-kernel (trivial sum).
    # Multi-core path: tiny per-core (16,128) partial blocks.
    return tuple(jnp.sum(o) for o in outs)


@partial(jax.jit, donate_argnums=(3,))
def omega_update(w2d, p2d, prev2d, omega2d, epsilon):
    """omega_new = omega + W / ((p - prev)^2 + epsilon), elementwise on slabs.

    The omega slab is updated in place (donated + aliased): callers must treat
    the input `omega2d` as consumed and keep only the returned slab."""
    R, C = p2d.shape
    assert C == LANE and R % ROW_CHUNK == 0, (R, C)
    blocks = R // TILE_R
    eps_arr = jnp.asarray(epsilon, jnp.float32).reshape(1)

    if NUM_CORES == 1:
        grid = (blocks,)
        stream = pl.BlockSpec((TILE_R, LANE), lambda i: (i, 0))
        semantics = ("arbitrary",)
    else:
        bpc = blocks // NUM_CORES
        grid = (NUM_CORES, bpc)
        stream = pl.BlockSpec((TILE_R, LANE), lambda c, i: (c * bpc + i, 0))
        semantics = (_CORE_PARALLEL, _ARBITRARY)

    return pl.pallas_call(
        _omega_update_kernel,
        out_shape=jax.ShapeDtypeStruct((R, LANE), omega2d.dtype),
        grid_spec=pltpu.PrefetchScalarGridSpec(
            num_scalar_prefetch=0,
            grid=grid,
            in_specs=[stream, stream, stream, stream,
                      pl.BlockSpec(memory_space=pltpu.MemorySpace.SMEM)],
            out_specs=stream,
        ),
        input_output_aliases={3: 0},   # new omega overwrites the old omega slab
        compiler_params=pltpu.CompilerParams(dimension_semantics=semantics),
    )(w2d, p2d, prev2d, omega2d, eps_arr)


# ----------------------------------------------------------------------------
# Loss wrappers (slab-based; fused whenever both regularizers are active)
# ----------------------------------------------------------------------------
def reg_losses(p2d, *, fisher2d=None, ewc_prev2d=None, omega2d=None,
               si_prev2d=None, gamma=1.0, online=True, ewc_task_count=1):
    """Returns (ewc_loss, si_surrogate_loss).  When both regularizers are
    active the reductions are fused into one kernel so the params slab is read
    from HBM only once."""
    have_ewc = fisher2d is not None and ewc_task_count > 0
    have_si = omega2d is not None
    g = gamma if online else 1.0
    zero = jnp.float32(0.0)
    if have_ewc and have_si:
        e_raw, s_raw = _weighted_sq_diff_sums(
            p2d, (fisher2d, omega2d), (ewc_prev2d, si_prev2d))
        return 0.5 * g * e_raw, s_raw
    if have_ewc:
        (e_raw,) = _weighted_sq_diff_sums(p2d, (fisher2d,), (ewc_prev2d,))
        return 0.5 * g * e_raw, zero
    if have_si:
        (s_raw,) = _weighted_sq_diff_sums(p2d, (omega2d,), (si_prev2d,))
        return zero, s_raw
    return zero, zero


def ewc_loss(p2d, ewc_prev2d, fisher2d, *, gamma=1.0, online=True,
             ewc_task_count=1):
    """Online EWC loss: 0.5 * gamma * sum(fisher * (p - prev)^2)."""
    return reg_losses(p2d, fisher2d=fisher2d, ewc_prev2d=ewc_prev2d,
                      gamma=gamma, online=online,
                      ewc_task_count=ewc_task_count)[0]


def surrogate_loss(p2d, si_prev2d, omega2d):
    """SI surrogate loss: sum(omega * (p - prev)^2)."""
    return reg_losses(p2d, omega2d=omega2d, si_prev2d=si_prev2d)[1]


# ----------------------------------------------------------------------------
# Parameter <-> slab packing glue (plain JAX; pack once and cache)
# ----------------------------------------------------------------------------
def pack_params(param_dict, names, dtype=jnp.float32):
    """Flatten params in `names` order, zero-pad, reshape to an (R, 128) slab.

    Pack ONCE per buffer set and cache the slab: repacking per call costs a
    full extra HBM pass per operand and would dominate these bandwidth-bound
    kernels.  Weighting slabs (fisher / omega-as-weight / W) may be packed as
    bfloat16 to cut HBM traffic; kernels upcast to f32 internally.  Prev-task
    snapshots should stay f32 ((p - prev) cancellation)."""
    flat = jnp.concatenate(
        [jnp.ravel(param_dict[n]).astype(dtype) for n in names])
    n = flat.shape[0]
    total = pl.cdiv(n, ROW_CHUNK * LANE) * (ROW_CHUNK * LANE)
    flat = jnp.pad(flat, (0, total - n))
    return flat.reshape(-1, LANE), n


def unpack_slab(slab, names, shapes, n_valid):
    """Inverse of pack_params (drops the zero padding)."""
    flat = slab.reshape(-1)[:n_valid]
    out, off = {}, 0
    for name in names:
        shp = shapes[name]
        sz = 1
        for s in shp:
            sz *= s
        out[name] = flat[off:off + sz].reshape(shp)
        off += sz
    return out


# ----------------------------------------------------------------------------
# Main
# ----------------------------------------------------------------------------
if __name__ == "__main__":
    key = jax.random.PRNGKey(0)

    # Synthetic classifier parameter set (small): in=32, hidden=64, classes=10
    names = ["fc1__weight", "fc1__bias", "classifier__weight", "classifier__bias"]
    shapes = {
        "fc1__weight": (64, 32),
        "fc1__bias": (64,),
        "classifier__weight": (10, 64),
        "classifier__bias": (10,),
    }

    keys = jax.random.split(key, 6 * len(names))
    ki = iter(keys)
    params = {n: jax.random.normal(next(ki), shapes[n], jnp.float32) * 0.1
              for n in names}
    ewc_prev = {n: params[n] + 0.05 * jax.random.normal(next(ki), shapes[n], jnp.float32)
                for n in names}
    si_prev = {n: params[n] + 0.03 * jax.random.normal(next(ki), shapes[n], jnp.float32)
               for n in names}
    fisher = {n: jnp.abs(jax.random.normal(next(ki), shapes[n], jnp.float32))
              for n in names}
    omega = {n: jnp.abs(jax.random.normal(next(ki), shapes[n], jnp.float32))
             for n in names}
    W = {n: jnp.abs(jax.random.normal(next(ki), shapes[n], jnp.float32)) * 0.01
         for n in names}

    gamma, epsilon = 1.0, 0.1

    # ---- pack static slabs ONCE (cache across training steps) ---------------
    ewc_prev2d, _ = pack_params(ewc_prev, names)
    si_prev2d, _ = pack_params(si_prev, names)
    fisher2d, _ = pack_params(fisher, names)
    omega2d, _ = pack_params(omega, names)
    w2d, _ = pack_params(W, names)
    # Optional: weighting slabs in bf16 (kernels upcast) -> less HBM traffic.
    fisher2d_bf, _ = pack_params(fisher, names, dtype=jnp.bfloat16)
    omega2d_bf, _ = pack_params(omega, names, dtype=jnp.bfloat16)

    # ---- pack params ONCE per optimizer step; shared by all kernels ---------
    p2d, n_valid = pack_params(params, names)

    # Fused EWC + SI losses (params slab read from HBM once).
    loss_ewc, loss_si = reg_losses(p2d, fisher2d=fisher2d, ewc_prev2d=ewc_prev2d,
                                   omega2d=omega2d, si_prev2d=si_prev2d,
                                   gamma=gamma)
    # Same, with bf16 weighting slabs.
    loss_ewc_bf, loss_si_bf = reg_losses(p2d, fisher2d=fisher2d_bf,
                                         ewc_prev2d=ewc_prev2d,
                                         omega2d=omega2d_bf,
                                         si_prev2d=si_prev2d, gamma=gamma)
    # Single-regularizer paths.
    loss_ewc_only = ewc_loss(p2d, ewc_prev2d, fisher2d, gamma=gamma)
    loss_si_only = surrogate_loss(p2d, si_prev2d, omega2d)

    # SI omega update (in place over the omega slab; omega2d is consumed here).
    new_omega2d = omega_update(w2d, p2d, si_prev2d, omega2d, epsilon)
    new_omega = unpack_slab(new_omega2d, names, shapes, n_valid)
    new_si_prev2d = p2d  # SI_prev_task <- current params (slab already packed)

    jax.block_until_ready((loss_ewc, loss_si, loss_ewc_bf, loss_si_bf,
                           loss_ewc_only, loss_si_only, new_omega2d,
                           new_si_prev2d))

    # ---- pure-JAX references -------------------------------------------------
    ref_ewc = 0.5 * gamma * sum(
        jnp.sum(fisher[n] * (params[n] - ewc_prev[n]) ** 2) for n in names)
    ref_si = sum(
        jnp.sum(omega[n] * (params[n] - si_prev[n]) ** 2) for n in names)
    fisher_rt = {n: fisher[n].astype(jnp.bfloat16).astype(jnp.float32) for n in names}
    omega_rt = {n: omega[n].astype(jnp.bfloat16).astype(jnp.float32) for n in names}
    ref_ewc_bf = 0.5 * gamma * sum(
        jnp.sum(fisher_rt[n] * (params[n] - ewc_prev[n]) ** 2) for n in names)
    ref_si_bf = sum(
        jnp.sum(omega_rt[n] * (params[n] - si_prev[n]) ** 2) for n in names)
    ref_omega = {n: omega[n] + W[n] / ((params[n] - si_prev[n]) ** 2 + epsilon)
                 for n in names}

    assert jnp.allclose(loss_ewc, ref_ewc, rtol=1e-5, atol=1e-5), (loss_ewc, ref_ewc)
    assert jnp.allclose(loss_si, ref_si, rtol=1e-5, atol=1e-5), (loss_si, ref_si)
    assert jnp.allclose(loss_ewc_only, ref_ewc, rtol=1e-5, atol=1e-5)
    assert jnp.allclose(loss_si_only, ref_si, rtol=1e-5, atol=1e-5)
    assert jnp.allclose(loss_ewc_bf, ref_ewc_bf, rtol=1e-5, atol=1e-5), (loss_ewc_bf, ref_ewc_bf)
    assert jnp.allclose(loss_si_bf, ref_si_bf, rtol=1e-5, atol=1e-5), (loss_si_bf, ref_si_bf)
    for n in names:
        assert jnp.allclose(new_omega[n], ref_omega[n], rtol=1e-5, atol=1e-5), n

    print("KERNEL_OK")
</pallas_src>

<mosaic_0001>
module attributes {stable_mosaic.version = 11 : i64} {
  func.func @kernel(%arg0: i32, %arg1: memref<512x128xf32, #tpu.memory_space<vmem>>, %arg2: memref<512x128xf32, #tpu.memory_space<vmem>>, %arg3: memref<512x128xf32, #tpu.memory_space<vmem>>, %arg4: memref<512x128xf32, #tpu.memory_space<vmem>>, %arg5: memref<512x128xf32, #tpu.memory_space<vmem>>, %arg6: memref<1x1xf32, #tpu.memory_space<smem>>, %arg7: memref<1x1xf32, #tpu.memory_space<smem>>, %arg8: memref<64x128xf32, #tpu.memory_space<vmem>>, %arg9: memref<64x128xf32, #tpu.memory_space<vmem>>) attributes {dimension_semantics = [#tpu.dimension_semantics<arbitrary>], iteration_bounds = array<i64: 1>, scalar_prefetch = 0 : i64, scratch_operands = 2 : i64, tpu.core_type = #tpu.core_type<tc>, window_params = [{transform_indices = @transform_0, window_bounds = array<i64: 512, 128>}, {transform_indices = @transform_1, window_bounds = array<i64: 512, 128>}, {transform_indices = @transform_2, window_bounds = array<i64: 512, 128>}, {transform_indices = @transform_3, window_bounds = array<i64: 512, 128>}, {transform_indices = @transform_4, window_bounds = array<i64: 512, 128>}, {transform_indices = @transform_5, window_bounds = array<i64: 1, 1>}, {transform_indices = @transform_6, window_bounds = array<i64: 1, 1>}]} {
    %c0_i32 = arith.constant 0 : i32
    %0 = arith.cmpi eq, %arg0, %c0_i32 : i32
    %1 = arith.extui %0 : i1 to i32
    %c0_i32_0 = arith.constant 0 : i32
    %2 = arith.cmpi ne, %1, %c0_i32_0 : i32
    scf.if %2 {
      %cst = arith.constant 0.000000e+00 : f32
      %438 = vector.broadcast %cst : f32 to vector<64x128xf32>
      %c0_323 = arith.constant 0 : index
      %c0_324 = arith.constant 0 : index
      %439 = vector.load %arg8[%c0_323, %c0_324] : memref<64x128xf32, #tpu.memory_space<vmem>>, vector<64x128xf32>
      tpu.vector_store %arg8[%c0_323, %c0_324], %438 {strides = array<i32>} : memref<64x128xf32, #tpu.memory_space<vmem>>, vector<64x128xf32>,
      %cst_325 = arith.constant 0.000000e+00 : f32
      %440 = vector.broadcast %cst_325 : f32 to vector<64x128xf32>
      %c0_326 = arith.constant 0 : index
      %c0_327 = arith.constant 0 : index
      %441 = vector.load %arg9[%c0_326, %c0_327] : memref<64x128xf32, #tpu.memory_space<vmem>>, vector<64x128xf32>
      tpu.vector_store %arg9[%c0_326, %c0_327], %440 {strides = array<i32>} : memref<64x128xf32, #tpu.memory_space<vmem>>, vector<64x128xf32>,
    } else {
    }
    %c0 = arith.constant 0 : index
    %c0_1 = arith.constant 0 : index
    %3 = vector.load %arg8[%c0, %c0_1] : memref<64x128xf32, #tpu.memory_space<vmem>>, vector<16x128xf32>
    %c16 = arith.constant 16 : index
    %c0_2 = arith.constant 0 : index
    %4 = vector.load %arg8[%c16, %c0_2] : memref<64x128xf32, #tpu.memory_space<vmem>>, vector<16x128xf32>
    %c32 = arith.constant 32 : index
    %c0_3 = arith.constant 0 : index
    %5 = vector.load %arg8[%c32, %c0_3] : memref<64x128xf32, #tpu.memory_space<vmem>>, vector<16x128xf32>
    %c48 = arith.constant 48 : index
    %c0_4 = arith.constant 0 : index
    %6 = vector.load %arg8[%c48, %c0_4] : memref<64x128xf32, #tpu.memory_space<vmem>>, vector<16x128xf32>
    %c0_5 = arith.constant 0 : index
    %c0_6 = arith.constant 0 : index
    %7 = vector.load %arg9[%c0_5, %c0_6] : memref<64x128xf32, #tpu.memory_space<vmem>>, vector<16x128xf32>
    %c16_7 = arith.constant 16 : index
    %c0_8 = arith.constant 0 : index
    %8 = vector.load %arg9[%c16_7, %c0_8] : memref<64x128xf32, #tpu.memory_space<vmem>>, vector<16x128xf32>
    %c32_9 = arith.constant 32 : index
    %c0_10 = arith.constant 0 : index
    %9 = vector.load %arg9[%c32_9, %c0_10] : memref<64x128xf32, #tpu.memory_space<vmem>>, vector<16x128xf32>
    %c48_11 = arith.constant 48 : index
    %c0_12 = arith.constant 0 : index
    %10 = vector.load %arg9[%c48_11, %c0_12] : memref<64x128xf32, #tpu.memory_space<vmem>>, vector<16x128xf32>
    %c0_13 = arith.constant 0 : index
    %c0_14 = arith.constant 0 : index
    %11 = vector.load %arg1[%c0_13, %c0_14] : memref<512x128xf32, #tpu.memory_space<vmem>>, vector<16x128xf32>
    %c0_15 = arith.constant 0 : index
    %c0_16 = arith.constant 0 : index
    %12 = vector.load %arg4[%c0_15, %c0_16] : memref<512x128xf32, #tpu.memory_space<vmem>>, vector<16x128xf32>
    %13 = arith.subf %11, %12 : vector<16x128xf32>
    %c0_17 = arith.constant 0 : index
    %c0_18 = arith.constant 0 : index
    %14 = vector.load %arg2[%c0_17, %c0_18] : memref<512x128xf32, #tpu.memory_space<vmem>>, vector<16x128xf32>
    %15 = arith.mulf %14, %13 : vector<16x128xf32>
    %16 = arith.mulf %15, %13 : vector<16x128xf32>
    %17 = arith.addf %3, %16 : vector<16x128xf32>
    %c0_19 = arith.constant 0 : index
    %c0_20 = arith.constant 0 : index
    %18 = vector.load %arg5[%c0_19, %c0_20] : memref<512x128xf32, #tpu.memory_space<vmem>>, vector<16x128xf32>
    %19 = arith.subf %11, %18 : vector<16x128xf32>
    %c0_21 = arith.constant 0 : index
    %c0_22 = arith.constant 0 : index
    %20 = vector.load %arg3[%c0_21, %c0_22] : memref<512x128xf32, #tpu.memory_space<vmem>>, vector<16x128xf32>
    %21 = arith.mulf %20, %19 : vector<16x128xf32>
    %22 = arith.mulf %21, %19 : vector<16x128xf32>
    %23 = arith.addf %7, %22 : vector<16x128xf32>
    %c16_23 = arith.constant 16 : index
    %c0_24 = arith.constant 0 : index
    %24 = vector.load %arg1[%c16_23, %c0_24] : memref<512x128xf32, #tpu.memory_space<vmem>>, vector<16x128xf32>
    %c16_25 = arith.constant 16 : index
    %c0_26 = arith.constant 0 : index
    %25 = vector.load %arg4[%c16_25, %c0_26] : memref<512x128xf32, #tpu.memory_space<vmem>>, vector<16x128xf32>
    %26 = arith.subf %24, %25 : vector<16x128xf32>
    %c16_27 = arith.constant 16 : index
    %c0_28 = arith.constant 0 : index
    %27 = vector.load %arg2[%c16_27, %c0_28] : memref<512x128xf32, #tpu.memory_space<vmem>>, vector<16x128xf32>
    %28 = arith.mulf %27, %26 : vector<16x128xf32>
    %29 = arith.mulf %28, %26 : vector<16x128xf32>
    %30 = arith.addf %4, %29 : vector<16x128xf32>
    %c16_29 = arith.constant 16 : index
    %c0_30 = arith.constant 0 : index
    %31 = vector.load %arg5[%c16_29, %c0_30] : memref<512x128xf32, #tpu.memory_space<vmem>>, vector<16x128xf32>
    %32 = arith.subf %24, %31 : vector<16x128xf32>
    %c16_31 = arith.constant 16 : index
    %c0_32 = arith.constant 0 : index
    %33 = vector.load %arg3[%c16_31, %c0_32] : memref<512x128xf32, #tpu.memory_space<vmem>>, vector<16x128xf32>
    %34 = arith.mulf %33, %32 : vector<16x128xf32>
    %35 = arith.mulf %34, %32 : vector<16x128xf32>
    %36 = arith.addf %8, %35 : vector<16x128xf32>
    %c32_33 = arith.constant 32 : index
    %c0_34 = arith.constant 0 : index
    %37 = vector.load %arg1[%c32_33, %c0_34] : memref<512x128xf32, #tpu.memory_space<vmem>>, vector<16x128xf32>
    %c32_35 = arith.constant 32 : index
    %c0_36 = arith.constant 0 : index
    %38 = vector.load %arg4[%c32_35, %c0_36] : memref<512x128xf32, #tpu.memory_space<vmem>>, vector<16x128xf32>
    %39 = arith.subf %37, %38 : vector<16x128xf32>
    %c32_37 = arith.constant 32 : index
    %c0_38 = arith.constant 0 : index
    %40 = vector.load %arg2[%c32_37, %c0_38] : memref<512x128xf32, #tpu.memory_space<vmem>>, vector<16x128xf32>
    %41 = arith.mulf %40, %39 : vector<16x128xf32>
    %42 = arith.mulf %41, %39 : vector<16x128xf32>
    %43 = arith.addf %5, %42 : vector<16x128xf32>
    %c32_39 = arith.constant 32 : index
    %c0_40 = arith.constant 0 : index
    %44 = vector.load %arg5[%c32_39, %c0_40] : memref<512x128xf32, #tpu.memory_space<vmem>>, vector<16x128xf32>
    %45 = arith.subf %37, %44 : vector<16x128xf32>
    %c32_41 = arith.constant 32 : index
    %c0_42 = arith.constant 0 : index
    %46 = vector.load %arg3[%c32_41, %c0_42] : memref<512x128xf32, #tpu.memory_space<vmem>>, vector<16x128xf32>
    %47 = arith.mulf %46, %45 : vector<16x128xf32>
    %48 = arith.mulf %47, %45 : vector<16x128xf32>
    %49 = arith.addf %9, %48 : vector<16x128xf32>
    %c48_43 = arith.constant 48 : index
    %c0_44 = arith.constant 0 : index
    %50 = vector.load %arg1[%c48_43, %c0_44] : memref<512x128xf32, #tpu.memory_space<vmem>>, vector<16x128xf32>
    %c48_45 = arith.constant 48 : index
    %c0_46 = arith.constant 0 : index
    %51 = vector.load %arg4[%c48_45, %c0_46] : memref<512x128xf32, #tpu.memory_space<vmem>>, vector<16x128xf32>
    %52 = arith.subf %50, %51 : vector<16x128xf32>
    %c48_47 = arith.constant 48 : index
    %c0_48 = arith.constant 0 : index
    %53 = vector.load %arg2[%c48_47, %c0_48] : memref<512x128xf32, #tpu.memory_space<vmem>>, vector<16x128xf32>
    %54 = arith.mulf %53, %52 : vector<16x128xf32>
    %55 = arith.mulf %54, %52 : vector<16x128xf32>
    %56 = arith.addf %6, %55 : vector<16x128xf32>
    %c48_49 = arith.constant 48 : index
    %c0_50 = arith.constant 0 : index
    %57 = vector.load %arg5[%c48_49, %c0_50] : memref<512x128xf32, #tpu.memory_space<vmem>>, vector<16x128xf32>
    %58 = arith.subf %50, %57 : vector<16x128xf32>
    %c48_51 = arith.constant 48 : index
    %c0_52 = arith.constant 0 : index
    %59 = vector.load %arg3[%c48_51, %c0_52] : memref<512x128xf32, #tpu.memory_space<vmem>>, vector<16x128xf32>
    %60 = arith.mulf %59, %58 : vector<16x128xf32>
    %61 = arith.mulf %60, %58 : vector<16x128xf32>
    %62 = arith.addf %10, %61 : vector<16x128xf32>
    %c64 = arith.constant 64 : index
    %c0_53 = arith.constant 0 : index
    %63 = vector.load %arg1[%c64, %c0_53] : memref<512x128xf32, #tpu.memory_space<vmem>>, vector<16x128xf32>
    %c64_54 = arith.constant 64 : index
    %c0_55 = arith.constant 0 : index
    %64 = vector.load %arg4[%c64_54, %c0_55] : memref<512x128xf32, #tpu.memory_space<vmem>>, vector<16x128xf32>
    %65 = arith.subf %63, %64 : vector<16x128xf32>
    %c64_56 = arith.constant 64 : index
    %c0_57 = arith.constant 0 : index
    %66 = vector.load %arg2[%c64_56, %c0_57] : memref<512x128xf32, #tpu.memory_space<vmem>>, vector<16x128xf32>
    %67 = arith.mulf %66, %65 : vector<16x128xf32>
    %68 = arith.mulf %67, %65 : vector<16x128xf32>
    %69 = arith.addf %17, %68 : vector<16x128xf32>
    %c64_58 = arith.constant 64 : index
    %c0_59 = arith.constant 0 : index
    %70 = vector.load %arg5[%c64_58, %c0_59] : memref<512x128xf32, #tpu.memory_space<vmem>>, vector<16x128xf32>
    %71 = arith.subf %63, %70 : vector<16x128xf32>
    %c64_60 = arith.constant 64 : index
    %c0_61 = arith.constant 0 : index
    %72 = vector.load %arg3[%c64_60, %c0_61] : memref<512x128xf32, #tpu.memory_space<vmem>>, vector<16x128xf32>
    %73 = arith.mulf %72, %71 : vector<16x128xf32>
    %74 = arith.mulf %73, %71 : vector<16x128xf32>
    %75 = arith.addf %23, %74 : vector<16x128xf32>
    %c80 = arith.constant 80 : index
    %c0_62 = arith.constant 0 : index
    %76 = vector.load %arg1[%c80, %c0_62] : memref<512x128xf32, #tpu.memory_space<vmem>>, vector<16x128xf32>
    %c80_63 = arith.constant 80 : index
    %c0_64 = arith.constant 0 : index
    %77 = vector.load %arg4[%c80_63, %c0_64] : memref<512x128xf32, #tpu.memory_space<vmem>>, vector<16x128xf32>
    %78 = arith.subf %76, %77 : vector<16x128xf32>
    %c80_65 = arith.constant 80 : index
    %c0_66 = arith.constant 0 : index
    %79 = vector.load %arg2[%c80_65, %c0_66] : memref<512x128xf32, #tpu.memory_space<vmem>>, vector<16x128xf32>
    %80 = arith.mulf %79, %78 : vector<16x128xf32>
    %81 = arith.mulf %80, %78 : vector<16x128xf32>
    %82 = arith.addf %30, %81 : vector<16x128xf32>
    %c80_67 = arith.constant 80 : index
    %c0_68 = arith.constant 0 : index
    %83 = vector.load %arg5[%c80_67, %c0_68] : memref<512x128xf32, #tpu.memory_space<vmem>>, vector<16x128xf32>
    %84 = arith.subf %76, %83 : vector<16x128xf32>
    %c80_69 = arith.constant 80 : index
    %c0_70 = arith.constant 0 : index
    %85 = vector.load %arg3[%c80_69, %c0_70] : memref<512x128xf32, #tpu.memory_space<vmem>>, vector<16x128xf32>
    %86 = arith.mulf %85, %84 : vector<16x128xf32>
    %87 = arith.mulf %86, %84 : vector<16x128xf32>
    %88 = arith.addf %36, %87 : vector<16x128xf32>
    %c96 = arith.constant 96 : index
    %c0_71 = arith.constant 0 : index
    %89 = vector.load %arg1[%c96, %c0_71] : memref<512x128xf32, #tpu.memory_space<vmem>>, vector<16x128xf32>
    %c96_72 = arith.constant 96 : index
    %c0_73 = arith.constant 0 : index
    %90 = vector.load %arg4[%c96_72, %c0_73] : memref<512x128xf32, #tpu.memory_space<vmem>>, vector<16x128xf32>
    %91 = arith.subf %89, %90 : vector<16x128xf32>
    %c96_74 = arith.constant 96 : index
    %c0_75 = arith.constant 0 : index
    %92 = vector.load %arg2[%c96_74, %c0_75] : memref<512x128xf32, #tpu.memory_space<vmem>>, vector<16x128xf32>
    %93 = arith.mulf %92, %91 : vector<16x128xf32>
    %94 = arith.mulf %93, %91 : vector<16x128xf32>
    %95 = arith.addf %43, %94 : vector<16x128xf32>
    %c96_76 = arith.constant 96 : index
    %c0_77 = arith.constant 0 : index
    %96 = vector.load %arg5[%c96_76, %c0_77] : memref<512x128xf32, #tpu.memory_space<vmem>>, vector<16x128xf32>
    %97 = arith.subf %89, %96 : vector<16x128xf32>
    %c96_78 = arith.constant 96 : index
    %c0_79 = arith.constant 0 : index
    %98 = vector.load %arg3[%c96_78, %c0_79] : memref<512x128xf32, #tpu.memory_space<vmem>>, vector<16x128xf32>
    %99 = arith.mulf %98, %97 : vector<16x128xf32>
    %100 = arith.mulf %99, %97 : vector<16x128xf32>
    %101 = arith.addf %49, %100 : vector<16x128xf32>
    %c112 = arith.constant 112 : index
    %c0_80 = arith.constant 0 : index
    %102 = vector.load %arg1[%c112, %c0_80] : memref<512x128xf32, #tpu.memory_space<vmem>>, vector<16x128xf32>
    %c112_81 = arith.constant 112 : index
    %c0_82 = arith.constant 0 : index
    %103 = vector.load %arg4[%c112_81, %c0_82] : memref<512x128xf32, #tpu.memory_space<vmem>>, vector<16x128xf32>
    %104 = arith.subf %102, %103 : vector<16x128xf32>
    %c112_83 = arith.constant 112 : index
    %c0_84 = arith.constant 0 : index
    %105 = vector.load %arg2[%c112_83, %c0_84] : memref<512x128xf32, #tpu.memory_space<vmem>>, vector<16x128xf32>
    %106 = arith.mulf %105, %104 : vector<16x128xf32>
    %107 = arith.mulf %106, %104 : vector<16x128xf32>
    %108 = arith.addf %56, %107 : vector<16x128xf32>
    %c112_85 = arith.constant 112 : index
    %c0_86 = arith.constant 0 : index
    %109 = vector.load %arg5[%c112_85, %c0_86] : memref<512x128xf32, #tpu.memory_space<vmem>>, vector<16x128xf32>
    %110 = arith.subf %102, %109 : vector<16x128xf32>
    %c112_87 = arith.constant 112 : index
    %c0_88 = arith.constant 0 : index
    %111 = vector.load %arg3[%c112_87, %c0_88] : memref<512x128xf32, #tpu.memory_space<vmem>>, vector<16x128xf32>
    %112 = arith.mulf %111, %110 : vector<16x128xf32>
    %113 = arith.mulf %112, %110 : vector<16x128xf32>
    %114 = arith.addf %62, %113 : vector<16x128xf32>
    %c128 = arith.constant 128 : index
    %c0_89 = arith.constant 0 : index
    %115 = vector.load %arg1[%c128, %c0_89] : memref<512x128xf32, #tpu.memory_space<vmem>>, vector<16x128xf32>
    %c128_90 = arith.constant 128 : index
    %c0_91 = arith.constant 0 : index
    %116 = vector.load %arg4[%c128_90, %c0_91] : memref<512x128xf32, #tpu.memory_space<vmem>>, vector<16x128xf32>
    %117 = arith.subf %115, %116 : vector<16x128xf32>
    %c128_92 = arith.constant 128 : index
    %c0_93 = arith.constant 0 : index
    %118 = vector.load %arg2[%c128_92, %c0_93] : memref<512x128xf32, #tpu.memory_space<vmem>>, vector<16x128xf32>
    %119 = arith.mulf %118, %117 : vector<16x128xf32>
    %120 = arith.mulf %119, %117 : vector<16x128xf32>
    %121 = arith.addf %69, %120 : vector<16x128xf32>
    %c128_94 = arith.constant 128 : index
    %c0_95 = arith.constant 0 : index
    %122 = vector.load %arg5[%c128_94, %c0_95] : memref<512x128xf32, #tpu.memory_space<vmem>>, vector<16x128xf32>
    %123 = arith.subf %115, %122 : vector<16x128xf32>
    %c128_96 = arith.constant 128 : index
    %c0_97 = arith.constant 0 : index
    %124 = vector.load %arg3[%c128_96, %c0_97] : memref<512x128xf32, #tpu.memory_space<vmem>>, vector<16x128xf32>
    %125 = arith.mulf %124, %123 : vector<16x128xf32>
    %126 = arith.mulf %125, %123 : vector<16x128xf32>
    %127 = arith.addf %75, %126 : vector<16x128xf32>
    %c144 = arith.constant 144 : index
    %c0_98 = arith.constant 0 : index
    %128 = vector.load %arg1[%c144, %c0_98] : memref<512x128xf32, #tpu.memory_space<vmem>>, vector<16x128xf32>
    %c144_99 = arith.constant 144 : index
    %c0_100 = arith.constant 0 : index
    %129 = vector.load %arg4[%c144_99, %c0_100] : memref<512x128xf32, #tpu.memory_space<vmem>>, vector<16x128xf32>
    %130 = arith.subf %128, %129 : vector<16x128xf32>
    %c144_101 = arith.constant 144 : index
    %c0_102 = arith.constant 0 : index
    %131 = vector.load %arg2[%c144_101, %c0_102] : memref<512x128xf32, #tpu.memory_space<vmem>>, vector<16x128xf32>
    %132 = arith.mulf %131, %130 : vector<16x128xf32>
    %133 = arith.mulf %132, %130 : vector<16x128xf32>
    %134 = arith.addf %82, %133 : vector<16x128xf32>
    %c144_103 = arith.constant 144 : index
    %c0_104 = arith.constant 0 : index
    %135 = vector.load %arg5[%c144_103, %c0_104] : memref<512x128xf32, #tpu.memory_space<vmem>>, vector<16x128xf32>
    %136 = arith.subf %128, %135 : vector<16x128xf32>
    %c144_105 = arith.constant 144 : index
    %c0_106 = arith.constant 0 : index
    %137 = vector.load %arg3[%c144_105, %c0_106] : memref<512x128xf32, #tpu.memory_space<vmem>>, vector<16x128xf32>
    %138 = arith.mulf %137, %136 : vector<16x128xf32>
    %139 = arith.mulf %138, %136 : vector<16x128xf32>
    %140 = arith.addf %88, %139 : vector<16x128xf32>
    %c160 = arith.constant 160 : index
    %c0_107 = arith.constant 0 : index
    %141 = vector.load %arg1[%c160, %c0_107] : memref<512x128xf32, #tpu.memory_space<vmem>>, vector<16x128xf32>
    %c160_108 = arith.constant 160 : index
    %c0_109 = arith.constant 0 : index
    %142 = vector.load %arg4[%c160_108, %c0_109] : memref<512x128xf32, #tpu.memory_space<vmem>>, vector<16x128xf32>
    %143 = arith.subf %141, %142 : vector<16x128xf32>
    %c160_110 = arith.constant 160 : index
    %c0_111 = arith.constant 0 : index
    %144 = vector.load %arg2[%c160_110, %c0_111] : memref<512x128xf32, #tpu.memory_space<vmem>>, vector<16x128xf32>
    %145 = arith.mulf %144, %143 : vector<16x128xf32>
    %146 = arith.mulf %145, %143 : vector<16x128xf32>
    %147 = arith.addf %95, %146 : vector<16x128xf32>
    %c160_112 = arith.constant 160 : index
    %c0_113 = arith.constant 0 : index
    %148 = vector.load %arg5[%c160_112, %c0_113] : memref<512x128xf32, #tpu.memory_space<vmem>>, vector<16x128xf32>
    %149 = arith.subf %141, %148 : vector<16x128xf32>
    %c160_114 = arith.constant 160 : index
    %c0_115 = arith.constant 0 : index
    %150 = vector.load %arg3[%c160_114, %c0_115] : memref<512x128xf32, #tpu.memory_space<vmem>>, vector<16x128xf32>
    %151 = arith.mulf %150, %149 : vector<16x128xf32>
    %152 = arith.mulf %151, %149 : vector<16x128xf32>
    %153 = arith.addf %101, %152 : vector<16x128xf32>
    %c176 = arith.constant 176 : index
    %c0_116 = arith.constant 0 : index
    %154 = vector.load %arg1[%c176, %c0_116] : memref<512x128xf32, #tpu.memory_space<vmem>>, vector<16x128xf32>
    %c176_117 = arith.constant 176 : index
    %c0_118 = arith.constant 0 : index
    %155 = vector.load %arg4[%c176_117, %c0_118] : memref<512x128xf32, #tpu.memory_space<vmem>>, vector<16x128xf32>
    %156 = arith.subf %154, %155 : vector<16x128xf32>
    %c176_119 = arith.constant 176 : index
    %c0_120 = arith.constant 0 : index
    %157 = vector.load %arg2[%c176_119, %c0_120] : memref<512x128xf32, #tpu.memory_space<vmem>>, vector<16x128xf32>
    %158 = arith.mulf %157, %156 : vector<16x128xf32>
    %159 = arith.mulf %158, %156 : vector<16x128xf32>
    %160 = arith.addf %108, %159 : vector<16x128xf32>
    %c176_121 = arith.constant 176 : index
    %c0_122 = arith.constant 0 : index
    %161 = vector.load %arg5[%c176_121, %c0_122] : memref<512x128xf32, #tpu.memory_space<vmem>>, vector<16x128xf32>
    %162 = arith.subf %154, %161 : vector<16x128xf32>
    %c176_123 = arith.constant 176 : index
    %c0_124 = arith.constant 0 : index
    %163 = vector.load %arg3[%c176_123, %c0_124] : memref<512x128xf32, #tpu.memory_space<vmem>>, vector<16x128xf32>
    %164 = arith.mulf %163, %162 : vector<16x128xf32>
    %165 = arith.mulf %164, %162 : vector<16x128xf32>
    %166 = arith.addf %114, %165 : vector<16x128xf32>
    %c192 = arith.constant 192 : index
    %c0_125 = arith.constant 0 : index
    %167 = vector.load %arg1[%c192, %c0_125] : memref<512x128xf32, #tpu.memory_space<vmem>>, vector<16x128xf32>
    %c192_126 = arith.constant 192 : index
    %c0_127 = arith.constant 0 : index
    %168 = vector.load %arg4[%c192_126, %c0_127] : memref<512x128xf32, #tpu.memory_space<vmem>>, vector<16x128xf32>
    %169 = arith.subf %167, %168 : vector<16x128xf32>
    %c192_128 = arith.constant 192 : index
    %c0_129 = arith.constant 0 : index
    %170 = vector.load %arg2[%c192_128, %c0_129] : memref<512x128xf32, #tpu.memory_space<vmem>>, vector<16x128xf32>
    %171 = arith.mulf %170, %169 : vector<16x128xf32>
    %172 = arith.mulf %171, %169 : vector<16x128xf32>
    %173 = arith.addf %121, %172 : vector<16x128xf32>
    %c192_130 = arith.constant 192 : index
    %c0_131 = arith.constant 0 : index
    %174 = vector.load %arg5[%c192_130, %c0_131] : memref<512x128xf32, #tpu.memory_space<vmem>>, vector<16x128xf32>
    %175 = arith.subf %167, %174 : vector<16x128xf32>
    %c192_132 = arith.constant 192 : index
    %c0_133 = arith.constant 0 : index
    %176 = vector.load %arg3[%c192_132, %c0_133] : memref<512x128xf32, #tpu.memory_space<vmem>>, vector<16x128xf32>
    %177 = arith.mulf %176, %175 : vector<16x128xf32>
    %178 = arith.mulf %177, %175 : vector<16x128xf32>
    %179 = arith.addf %127, %178 : vector<16x128xf32>
    %c208 = arith.constant 208 : index
    %c0_134 = arith.constant 0 : index
    %180 = vector.load %arg1[%c208, %c0_134] : memref<512x128xf32, #tpu.memory_space<vmem>>, vector<16x128xf32>
    %c208_135 = arith.constant 208 : index
    %c0_136 = arith.constant 0 : index
    %181 = vector.load %arg4[%c208_135, %c0_136] : memref<512x128xf32, #tpu.memory_space<vmem>>, vector<16x128xf32>
    %182 = arith.subf %180, %181 : vector<16x128xf32>
    %c208_137 = arith.constant 208 : index
    %c0_138 = arith.constant 0 : index
    %183 = vector.load %arg2[%c208_137, %c0_138] : memref<512x128xf32, #tpu.memory_space<vmem>>, vector<16x128xf32>
    %184 = arith.mulf %183, %182 : vector<16x128xf32>
    %185 = arith.mulf %184, %182 : vector<16x128xf32>
    %186 = arith.addf %134, %185 : vector<16x128xf32>
    %c208_139 = arith.constant 208 : index
    %c0_140 = arith.constant 0 : index
    %187 = vector.load %arg5[%c208_139, %c0_140] : memref<512x128xf32, #tpu.memory_space<vmem>>, vector<16x128xf32>
    %188 = arith.subf %180, %187 : vector<16x128xf32>
    %c208_141 = arith.constant 208 : index
    %c0_142 = arith.constant 0 : index
    %189 = vector.load %arg3[%c208_141, %c0_142] : memref<512x128xf32, #tpu.memory_space<vmem>>, vector<16x128xf32>
    %190 = arith.mulf %189, %188 : vector<16x128xf32>
    %191 = arith.mulf %190, %188 : vector<16x128xf32>
    %192 = arith.addf %140, %191 : vector<16x128xf32>
    %c224 = arith.constant 224 : index
    %c0_143 = arith.constant 0 : index
    %193 = vector.load %arg1[%c224, %c0_143] : memref<512x128xf32, #tpu.memory_space<vmem>>, vector<16x128xf32>
    %c224_144 = arith.constant 224 : index
    %c0_145 = arith.constant 0 : index
    %194 = vector.load %arg4[%c224_144, %c0_145] : memref<512x128xf32, #tpu.memory_space<vmem>>, vector<16x128xf32>
    %195 = arith.subf %193, %194 : vector<16x128xf32>
    %c224_146 = arith.constant 224 : index
    %c0_147 = arith.constant 0 : index
    %196 = vector.load %arg2[%c224_146, %c0_147] : memref<512x128xf32, #tpu.memory_space<vmem>>, vector<16x128xf32>
    %197 = arith.mulf %196, %195 : vector<16x128xf32>
    %198 = arith.mulf %197, %195 : vector<16x128xf32>
    %199 = arith.addf %147, %198 : vector<16x128xf32>
    %c224_148 = arith.constant 224 : index
    %c0_149 = arith.constant 0 : index
    %200 = vector.load %arg5[%c224_148, %c0_149] : memref<512x128xf32, #tpu.memory_space<vmem>>, vector<16x128xf32>
    %201 = arith.subf %193, %200 : vector<16x128xf32>
    %c224_150 = arith.constant 224 : index
    %c0_151 = arith.constant 0 : index
    %202 = vector.load %arg3[%c224_150, %c0_151] : memref<512x128xf32, #tpu.memory_space<vmem>>, vector<16x128xf32>
    %203 = arith.mulf %202, %201 : vector<16x128xf32>
    %204 = arith.mulf %203, %201 : vector<16x128xf32>
    %205 = arith.addf %153, %204 : vector<16x128xf32>
    %c240 = arith.constant 240 : index
    %c0_152 = arith.constant 0 : index
    %206 = vector.load %arg1[%c240, %c0_152] : memref<512x128xf32, #tpu.memory_space<vmem>>, vector<16x128xf32>
    %c240_153 = arith.constant 240 : index
    %c0_154 = arith.constant 0 : index
    %207 = vector.load %arg4[%c240_153, %c0_154] : memref<512x128xf32, #tpu.memory_space<vmem>>, vector<16x128xf32>
    %208 = arith.subf %206, %207 : vector<16x128xf32>
    %c240_155 = arith.constant 240 : index
    %c0_156 = arith.constant 0 : index
    %209 = vector.load %arg2[%c240_155, %c0_156] : memref<512x128xf32, #tpu.memory_space<vmem>>, vector<16x128xf32>
    %210 = arith.mulf %209, %208 : vector<16x128xf32>
    %211 = arith.mulf %210, %208 : vector<16x128xf32>
    %212 = arith.addf %160, %211 : vector<16x128xf32>
    %c240_157 = arith.constant 240 : index
    %c0_158 = arith.constant 0 : index
    %213 = vector.load %arg5[%c240_157, %c0_158] : memref<512x128xf32, #tpu.memory_space<vmem>>, vector<16x128xf32>
    %214 = arith.subf %206, %213 : vector<16x128xf32>
    %c240_159 = arith.constant 240 : index
    %c0_160 = arith.constant 0 : index
    %215 = vector.load %arg3[%c240_159, %c0_160] : memref<512x128xf32, #tpu.memory_space<vmem>>, vector<16x128xf32>
    %216 = arith.mulf %215, %214 : vector<16x128xf32>
    %217 = arith.mulf %216, %214 : vector<16x128xf32>
    %218 = arith.addf %166, %217 : vector<16x128xf32>
    %c256 = arith.constant 256 : index
    %c0_161 = arith.constant 0 : index
    %219 = vector.load %arg1[%c256, %c0_161] : memref<512x128xf32, #tpu.memory_space<vmem>>, vector<16x128xf32>
    %c256_162 = arith.constant 256 : index
    %c0_163 = arith.constant 0 : index
    %220 = vector.load %arg4[%c256_162, %c0_163] : memref<512x128xf32, #tpu.memory_space<vmem>>, vector<16x128xf32>
    %221 = arith.subf %219, %220 : vector<16x128xf32>
    %c256_164 = arith.constant 256 : index
    %c0_165 = arith.constant 0 : index
    %222 = vector.load %arg2[%c256_164, %c0_165] : memref<512x128xf32, #tpu.memory_space<vmem>>, vector<16x128xf32>
    %223 = arith.mulf %222, %221 : vector<16x128xf32>
    %224 = arith.mulf %223, %221 : vector<16x128xf32>
    %225 = arith.addf %173, %224 : vector<16x128xf32>
    %c256_166 = arith.constant 256 : index
    %c0_167 = arith.constant 0 : index
    %226 = vector.load %arg5[%c256_166, %c0_167] : memref<512x128xf32, #tpu.memory_space<vmem>>, vector<16x128xf32>
    %227 = arith.subf %219, %226 : vector<16x128xf32>
    %c256_168 = arith.constant 256 : index
    %c0_169 = arith.constant 0 : index
    %228 = vector.load %arg3[%c256_168, %c0_169] : memref<512x128xf32, #tpu.memory_space<vmem>>, vector<16x128xf32>
    %229 = arith.mulf %228, %227 : vector<16x128xf32>
    %230 = arith.mulf %229, %227 : vector<16x128xf32>
    %231 = arith.addf %179, %230 : vector<16x128xf32>
    %c272 = arith.constant 272 : index
    %c0_170 = arith.constant 0 : index
    %232 = vector.load %arg1[%c272, %c0_170] : memref<512x128xf32, #tpu.memory_space<vmem>>, vector<16x128xf32>
    %c272_171 = arith.constant 272 : index
    %c0_172 = arith.constant 0 : index
    %233 = vector.load %arg4[%c272_171, %c0_172] : memref<512x128xf32, #tpu.memory_space<vmem>>, vector<16x128xf32>
    %234 = arith.subf %232, %233 : vector<16x128xf32>
    %c272_173 = arith.constant 272 : index
    %c0_174 = arith.constant 0 : index
    %235 = vector.load %arg2[%c272_173, %c0_174] : memref<512x128xf32, #tpu.memory_space<vmem>>, vector<16x128xf32>
    %236 = arith.mulf %235, %234 : vector<16x128xf32>
    %237 = arith.mulf %236, %234 : vector<16x128xf32>
    %238 = arith.addf %186, %237 : vector<16x128xf32>
    %c272_175 = arith.constant 272 : index
    %c0_176 = arith.constant 0 : index
    %239 = vector.load %arg5[%c272_175, %c0_176] : memref<512x128xf32, #tpu.memory_space<vmem>>, vector<16x128xf32>
    %240 = arith.subf %232, %239 : vector<16x128xf32>
    %c272_177 = arith.constant 272 : index
    %c0_178 = arith.constant 0 : index
    %241 = vector.load %arg3[%c272_177, %c0_178] : memref<512x128xf32, #tpu.memory_space<vmem>>, vector<16x128xf32>
    %242 = arith.mulf %241, %240 : vector<16x128xf32>
    %243 = arith.mulf %242, %240 : vector<16x128xf32>
    %244 = arith.addf %192, %243 : vector<16x128xf32>
    %c288 = arith.constant 288 : index
    %c0_179 = arith.constant 0 : index
    %245 = vector.load %arg1[%c288, %c0_179] : memref<512x128xf32, #tpu.memory_space<vmem>>, vector<16x128xf32>
    %c288_180 = arith.constant 288 : index
    %c0_181 = arith.constant 0 : index
    %246 = vector.load %arg4[%c288_180, %c0_181] : memref<512x128xf32, #tpu.memory_space<vmem>>, vector<16x128xf32>
    %247 = arith.subf %245, %246 : vector<16x128xf32>
    %c288_182 = arith.constant 288 : index
    %c0_183 = arith.constant 0 : index
    %248 = vector.load %arg2[%c288_182, %c0_183] : memref<512x128xf32, #tpu.memory_space<vmem>>, vector<16x128xf32>
    %249 = arith.mulf %248, %247 : vector<16x128xf32>
    %250 = arith.mulf %249, %247 : vector<16x128xf32>
    %251 = arith.addf %199, %250 : vector<16x128xf32>
    %c288_184 = arith.constant 288 : index
    %c0_185 = arith.constant 0 : index
    %252 = vector.load %arg5[%c288_184, %c0_185] : memref<512x128xf32, #tpu.memory_space<vmem>>, vector<16x128xf32>
    %253 = arith.subf %245, %252 : vector<16x128xf32>
    %c288_186 = arith.constant 288 : index
    %c0_187 = arith.constant 0 : index
    %254 = vector.load %arg3[%c288_186, %c0_187] : memref<512x128xf32, #tpu.memory_space<vmem>>, vector<16x128xf32>
    %255 = arith.mulf %254, %253 : vector<16x128xf32>
    %256 = arith.mulf %255, %253 : vector<16x128xf32>
    %257 = arith.addf %205, %256 : vector<16x128xf32>
    %c304 = arith.constant 304 : index
    %c0_188 = arith.constant 0 : index
    %258 = vector.load %arg1[%c304, %c0_188] : memref<512x128xf32, #tpu.memory_space<vmem>>, vector<16x128xf32>
    %c304_189 = arith.constant 304 : index
    %c0_190 = arith.constant 0 : index
    %259 = vector.load %arg4[%c304_189, %c0_190] : memref<512x128xf32, #tpu.memory_space<vmem>>, vector<16x128xf32>
    %260 = arith.subf %258, %259 : vector<16x128xf32>
    %c304_191 = arith.constant 304 : index
    %c0_192 = arith.constant 0 : index
    %261 = vector.load %arg2[%c304_191, %c0_192] : memref<512x128xf32, #tpu.memory_space<vmem>>, vector<16x128xf32>
    %262 = arith.mulf %261, %260 : vector<16x128xf32>
    %263 = arith.mulf %262, %260 : vector<16x128xf32>
    %264 = arith.addf %212, %263 : vector<16x128xf32>
    %c304_193 = arith.constant 304 : index
    %c0_194 = arith.constant 0 : index
    %265 = vector.load %arg5[%c304_193, %c0_194] : memref<512x128xf32, #tpu.memory_space<vmem>>, vector<16x128xf32>
    %266 = arith.subf %258, %265 : vector<16x128xf32>
    %c304_195 = arith.constant 304 : index
    %c0_196 = arith.constant 0 : index
    %267 = vector.load %arg3[%c304_195, %c0_196] : memref<512x128xf32, #tpu.memory_space<vmem>>, vector<16x128xf32>
    %268 = arith.mulf %267, %266 : vector<16x128xf32>
    %269 = arith.mulf %268, %266 : vector<16x128xf32>
    %270 = arith.addf %218, %269 : vector<16x128xf32>
    %c320 = arith.constant 320 : index
    %c0_197 = arith.constant 0 : index
    %271 = vector.load %arg1[%c320, %c0_197] : memref<512x128xf32, #tpu.memory_space<vmem>>, vector<16x128xf32>
    %c320_198 = arith.constant 320 : index
    %c0_199 = arith.constant 0 : index
    %272 = vector.load %arg4[%c320_198, %c0_199] : memref<512x128xf32, #tpu.memory_space<vmem>>, vector<16x128xf32>
    %273 = arith.subf %271, %272 : vector<16x128xf32>
    %c320_200 = arith.constant 320 : index
    %c0_201 = arith.constant 0 : index
    %274 = vector.load %arg2[%c320_200, %c0_201] : memref<512x128xf32, #tpu.memory_space<vmem>>, vector<16x128xf32>
    %275 = arith.mulf %274, %273 : vector<16x128xf32>
    %276 = arith.mulf %275, %273 : vector<16x128xf32>
    %277 = arith.addf %225, %276 : vector<16x128xf32>
    %c320_202 = arith.constant 320 : index
    %c0_203 = arith.constant 0 : index
    %278 = vector.load %arg5[%c320_202, %c0_203] : memref<512x128xf32, #tpu.memory_space<vmem>>, vector<16x128xf32>
    %279 = arith.subf %271, %278 : vector<16x128xf32>
    %c320_204 = arith.constant 320 : index
    %c0_205 = arith.constant 0 : index
    %280 = vector.load %arg3[%c320_204, %c0_205] : memref<512x128xf32, #tpu.memory_space<vmem>>, vector<16x128xf32>
    %281 = arith.mulf %280, %279 : vector<16x128xf32>
    %282 = arith.mulf %281, %279 : vector<16x128xf32>
    %283 = arith.addf %231, %282 : vector<16x128xf32>
    %c336 = arith.constant 336 : index
    %c0_206 = arith.constant 0 : index
    %284 = vector.load %arg1[%c336, %c0_206] : memref<512x128xf32, #tpu.memory_space<vmem>>, vector<16x128xf32>
    %c336_207 = arith.constant 336 : index
    %c0_208 = arith.constant 0 : index
    %285 = vector.load %arg4[%c336_207, %c0_208] : memref<512x128xf32, #tpu.memory_space<vmem>>, vector<16x128xf32>
    %286 = arith.subf %284, %285 : vector<16x128xf32>
    %c336_209 = arith.constant 336 : index
    %c0_210 = arith.constant 0 : index
    %287 = vector.load %arg2[%c336_209, %c0_210] : memref<512x128xf32, #tpu.memory_space<vmem>>, vector<16x128xf32>
    %288 = arith.mulf %287, %286 : vector<16x128xf32>
    %289 = arith.mulf %288, %286 : vector<16x128xf32>
    %290 = arith.addf %238, %289 : vector<16x128xf32>
    %c336_211 = arith.constant 336 : index
    %c0_212 = arith.constant 0 : index
    %291 = vector.load %arg5[%c336_211, %c0_212] : memref<512x128xf32, #tpu.memory_space<vmem>>, vector<16x128xf32>
    %292 = arith.subf %284, %291 : vector<16x128xf32>
    %c336_213 = arith.constant 336 : index
    %c0_214 = arith.constant 0 : index
    %293 = vector.load %arg3[%c336_213, %c0_214] : memref<512x128xf32, #tpu.memory_space<vmem>>, vector<16x128xf32>
    %294 = arith.mulf %293, %292 : vector<16x128xf32>
    %295 = arith.mulf %294, %292 : vector<16x128xf32>
    %296 = arith.addf %244, %295 : vector<16x128xf32>
    %c352 = arith.constant 352 : index
    %c0_215 = arith.constant 0 : index
    %297 = vector.load %arg1[%c352, %c0_215] : memref<512x128xf32, #tpu.memory_space<vmem>>, vector<16x128xf32>
    %c352_216 = arith.constant 352 : index
    %c0_217 = arith.constant 0 : index
    %298 = vector.load %arg4[%c352_216, %c0_217] : memref<512x128xf32, #tpu.memory_space<vmem>>, vector<16x128xf32>
    %299 = arith.subf %297, %298 : vector<16x128xf32>
    %c352_218 = arith.constant 352 : index
    %c0_219 = arith.constant 0 : index
    %300 = vector.load %arg2[%c352_218, %c0_219] : memref<512x128xf32, #tpu.memory_space<vmem>>, vector<16x128xf32>
    %301 = arith.mulf %300, %299 : vector<16x128xf32>
    %302 = arith.mulf %301, %299 : vector<16x128xf32>
    %303 = arith.addf %251, %302 : vector<16x128xf32>
    %c352_220 = arith.constant 352 : index
    %c0_221 = arith.constant 0 : index
    %304 = vector.load %arg5[%c352_220, %c0_221] : memref<512x128xf32, #tpu.memory_space<vmem>>, vector<16x128xf32>
    %305 = arith.subf %297, %304 : vector<16x128xf32>
    %c352_222 = arith.constant 352 : index
    %c0_223 = arith.constant 0 : index
    %306 = vector.load %arg3[%c352_222, %c0_223] : memref<512x128xf32, #tpu.memory_space<vmem>>, vector<16x128xf32>
    %307 = arith.mulf %306, %305 : vector<16x128xf32>
    %308 = arith.mulf %307, %305 : vector<16x128xf32>
    %309 = arith.addf %257, %308 : vector<16x128xf32>
    %c368 = arith.constant 368 : index
    %c0_224 = arith.constant 0 : index
    %310 = vector.load %arg1[%c368, %c0_224] : memref<512x128xf32, #tpu.memory_space<vmem>>, vector<16x128xf32>
    %c368_225 = arith.constant 368 : index
    %c0_226 = arith.constant 0 : index
    %311 = vector.load %arg4[%c368_225, %c0_226] : memref<512x128xf32, #tpu.memory_space<vmem>>, vector<16x128xf32>
    %312 = arith.subf %310, %311 : vector<16x128xf32>
    %c368_227 = arith.constant 368 : index
    %c0_228 = arith.constant 0 : index
    %313 = vector.load %arg2[%c368_227, %c0_228] : memref<512x128xf32, #tpu.memory_space<vmem>>, vector<16x128xf32>
    %314 = arith.mulf %313, %312 : vector<16x128xf32>
    %315 = arith.mulf %314, %312 : vector<16x128xf32>
    %316 = arith.addf %264, %315 : vector<16x128xf32>
    %c368_229 = arith.constant 368 : index
    %c0_230 = arith.constant 0 : index
    %317 = vector.load %arg5[%c368_229, %c0_230] : memref<512x128xf32, #tpu.memory_space<vmem>>, vector<16x128xf32>
    %318 = arith.subf %310, %317 : vector<16x128xf32>
    %c368_231 = arith.constant 368 : index
    %c0_232 = arith.constant 0 : index
    %319 = vector.load %arg3[%c368_231, %c0_232] : memref<512x128xf32, #tpu.memory_space<vmem>>, vector<16x128xf32>
    %320 = arith.mulf %319, %318 : vector<16x128xf32>
    %321 = arith.mulf %320, %318 : vector<16x128xf32>
    %322 = arith.addf %270, %321 : vector<16x128xf32>
    %c384 = arith.constant 384 : index
    %c0_233 = arith.constant 0 : index
    %323 = vector.load %arg1[%c384, %c0_233] : memref<512x128xf32, #tpu.memory_space<vmem>>, vector<16x128xf32>
    %c384_234 = arith.constant 384 : index
    %c0_235 = arith.constant 0 : index
    %324 = vector.load %arg4[%c384_234, %c0_235] : memref<512x128xf32, #tpu.memory_space<vmem>>, vector<16x128xf32>
    %325 = arith.subf %323, %324 : vector<16x128xf32>
    %c384_236 = arith.constant 384 : index
    %c0_237 = arith.constant 0 : index
    %326 = vector.load %arg2[%c384_236, %c0_237] : memref<512x128xf32, #tpu.memory_space<vmem>>, vector<16x128xf32>
    %327 = arith.mulf %326, %325 : vector<16x128xf32>
    %328 = arith.mulf %327, %325 : vector<16x128xf32>
    %329 = arith.addf %277, %328 : vector<16x128xf32>
    %c384_238 = arith.constant 384 : index
    %c0_239 = arith.constant 0 : index
    %330 = vector.load %arg5[%c384_238, %c0_239] : memref<512x128xf32, #tpu.memory_space<vmem>>, vector<16x128xf32>
    %331 = arith.subf %323, %330 : vector<16x128xf32>
    %c384_240 = arith.constant 384 : index
    %c0_241 = arith.constant 0 : index
    %332 = vector.load %arg3[%c384_240, %c0_241] : memref<512x128xf32, #tpu.memory_space<vmem>>, vector<16x128xf32>
    %333 = arith.mulf %332, %331 : vector<16x128xf32>
    %334 = arith.mulf %333, %331 : vector<16x128xf32>
    %335 = arith.addf %283, %334 : vector<16x128xf32>
    %c400 = arith.constant 400 : index
    %c0_242 = arith.constant 0 : index
    %336 = vector.load %arg1[%c400, %c0_242] : memref<512x128xf32, #tpu.memory_space<vmem>>, vector<16x128xf32>
    %c400_243 = arith.constant 400 : index
    %c0_244 = arith.constant 0 : index
    %337 = vector.load %arg4[%c400_243, %c0_244] : memref<512x128xf32, #tpu.memory_space<vmem>>, vector<16x128xf32>
    %338 = arith.subf %336, %337 : vector<16x128xf32>
    %c400_245 = arith.constant 400 : index
    %c0_246 = arith.constant 0 : index
    %339 = vector.load %arg2[%c400_245, %c0_246] : memref<512x128xf32, #tpu.memory_space<vmem>>, vector<16x128xf32>
    %340 = arith.mulf %339, %338 : vector<16x128xf32>
    %341 = arith.mulf %340, %338 : vector<16x128xf32>
    %342 = arith.addf %290, %341 : vector<16x128xf32>
    %c400_247 = arith.constant 400 : index
    %c0_248 = arith.constant 0 : index
    %343 = vector.load %arg5[%c400_247, %c0_248] : memref<512x128xf32, #tpu.memory_space<vmem>>, vector<16x128xf32>
    %344 = arith.subf %336, %343 : vector<16x128xf32>
    %c400_249 = arith.constant 400 : index
    %c0_250 = arith.constant 0 : index
    %345 = vector.load %arg3[%c400_249, %c0_250] : memref<512x128xf32, #tpu.memory_space<vmem>>, vector<16x128xf32>
    %346 = arith.mulf %345, %344 : vector<16x128xf32>
    %347 = arith.mulf %346, %344 : vector<16x128xf32>
    %348 = arith.addf %296, %347 : vector<16x128xf32>
    %c416 = arith.constant 416 : index
    %c0_251 = arith.constant 0 : index
    %349 = vector.load %arg1[%c416, %c0_251] : memref<512x128xf32, #tpu.memory_space<vmem>>, vector<16x128xf32>
    %c416_252 = arith.constant 416 : index
    %c0_253 = arith.constant 0 : index
    %350 = vector.load %arg4[%c416_252, %c0_253] : memref<512x128xf32, #tpu.memory_space<vmem>>, vector<16x128xf32>
    %351 = arith.subf %349, %350 : vector<16x128xf32>
    %c416_254 = arith.constant 416 : index
    %c0_255 = arith.constant 0 : index
    %352 = vector.load %arg2[%c416_254, %c0_255] : memref<512x128xf32, #tpu.memory_space<vmem>>, vector<16x128xf32>
    %353 = arith.mulf %352, %351 : vector<16x128xf32>
    %354 = arith.mulf %353, %351 : vector<16x128xf32>
    %355 = arith.addf %303, %354 : vector<16x128xf32>
    %c416_256 = arith.constant 416 : index
    %c0_257 = arith.constant 0 : index
    %356 = vector.load %arg5[%c416_256, %c0_257] : memref<512x128xf32, #tpu.memory_space<vmem>>, vector<16x128xf32>
    %357 = arith.subf %349, %356 : vector<16x128xf32>
    %c416_258 = arith.constant 416 : index
    %c0_259 = arith.constant 0 : index
    %358 = vector.load %arg3[%c416_258, %c0_259] : memref<512x128xf32, #tpu.memory_space<vmem>>, vector<16x128xf32>
    %359 = arith.mulf %358, %357 : vector<16x128xf32>
    %360 = arith.mulf %359, %357 : vector<16x128xf32>
    %361 = arith.addf %309, %360 : vector<16x128xf32>
    %c432 = arith.constant 432 : index
    %c0_260 = arith.constant 0 : index
    %362 = vector.load %arg1[%c432, %c0_260] : memref<512x128xf32, #tpu.memory_space<vmem>>, vector<16x128xf32>
    %c432_261 = arith.constant 432 : index
    %c0_262 = arith.constant 0 : index
    %363 = vector.load %arg4[%c432_261, %c0_262] : memref<512x128xf32, #tpu.memory_space<vmem>>, vector<16x128xf32>
    %364 = arith.subf %362, %363 : vector<16x128xf32>
    %c432_263 = arith.constant 432 : index
    %c0_264 = arith.constant 0 : index
    %365 = vector.load %arg2[%c432_263, %c0_264] : memref<512x128xf32, #tpu.memory_space<vmem>>, vector<16x128xf32>
    %366 = arith.mulf %365, %364 : vector<16x128xf32>
    %367 = arith.mulf %366, %364 : vector<16x128xf32>
    %368 = arith.addf %316, %367 : vector<16x128xf32>
    %c432_265 = arith.constant 432 : index
    %c0_266 = arith.constant 0 : index
    %369 = vector.load %arg5[%c432_265, %c0_266] : memref<512x128xf32, #tpu.memory_space<vmem>>, vector<16x128xf32>
    %370 = arith.subf %362, %369 : vector<16x128xf32>
    %c432_267 = arith.constant 432 : index
    %c0_268 = arith.constant 0 : index
    %371 = vector.load %arg3[%c432_267, %c0_268] : memref<512x128xf32, #tpu.memory_space<vmem>>, vector<16x128xf32>
    %372 = arith.mulf %371, %370 : vector<16x128xf32>
    %373 = arith.mulf %372, %370 : vector<16x128xf32>
    %374 = arith.addf %322, %373 : vector<16x128xf32>
    %c448 = arith.constant 448 : index
    %c0_269 = arith.constant 0 : index
    %375 = vector.load %arg1[%c448, %c0_269] : memref<512x128xf32, #tpu.memory_space<vmem>>, vector<16x128xf32>
    %c448_270 = arith.constant 448 : index
    %c0_271 = arith.constant 0 : index
    %376 = vector.load %arg4[%c448_270, %c0_271] : memref<512x128xf32, #tpu.memory_space<vmem>>, vector<16x128xf32>
    %377 = arith.subf %375, %376 : vector<16x128xf32>
    %c448_272 = arith.constant 448 : index
    %c0_273 = arith.constant 0 : index
    %378 = vector.load %arg2[%c448_272, %c0_273] : memref<512x128xf32, #tpu.memory_space<vmem>>, vector<16x128xf32>
    %379 = arith.mulf %378, %377 : vector<16x128xf32>
    %380 = arith.mulf %379, %377 : vector<16x128xf32>
    %381 = arith.addf %329, %380 : vector<16x128xf32>
    %c448_274 = arith.constant 448 : index
    %c0_275 = arith.constant 0 : index
    %382 = vector.load %arg5[%c448_274, %c0_275] : memref<512x128xf32, #tpu.memory_space<vmem>>, vector<16x128xf32>
    %383 = arith.subf %375, %382 : vector<16x128xf32>
    %c448_276 = arith.constant 448 : index
    %c0_277 = arith.constant 0 : index
    %384 = vector.load %arg3[%c448_276, %c0_277] : memref<512x128xf32, #tpu.memory_space<vmem>>, vector<16x128xf32>
    %385 = arith.mulf %384, %383 : vector<16x128xf32>
    %386 = arith.mulf %385, %383 : vector<16x128xf32>
    %387 = arith.addf %335, %386 : vector<16x128xf32>
    %c464 = arith.constant 464 : index
    %c0_278 = arith.constant 0 : index
    %388 = vector.load %arg1[%c464, %c0_278] : memref<512x128xf32, #tpu.memory_space<vmem>>, vector<16x128xf32>
    %c464_279 = arith.constant 464 : index
    %c0_280 = arith.constant 0 : index
    %389 = vector.load %arg4[%c464_279, %c0_280] : memref<512x128xf32, #tpu.memory_space<vmem>>, vector<16x128xf32>
    %390 = arith.subf %388, %389 : vector<16x128xf32>
    %c464_281 = arith.constant 464 : index
    %c0_282 = arith.constant 0 : index
    %391 = vector.load %arg2[%c464_281, %c0_282] : memref<512x128xf32, #tpu.memory_space<vmem>>, vector<16x128xf32>
    %392 = arith.mulf %391, %390 : vector<16x128xf32>
    %393 = arith.mulf %392, %390 : vector<16x128xf32>
    %394 = arith.addf %342, %393 : vector<16x128xf32>
    %c464_283 = arith.constant 464 : index
    %c0_284 = arith.constant 0 : index
    %395 = vector.load %arg5[%c464_283, %c0_284] : memref<512x128xf32, #tpu.memory_space<vmem>>, vector<16x128xf32>
    %396 = arith.subf %388, %395 : vector<16x128xf32>
    %c464_285 = arith.constant 464 : index
    %c0_286 = arith.constant 0 : index
    %397 = vector.load %arg3[%c464_285, %c0_286] : memref<512x128xf32, #tpu.memory_space<vmem>>, vector<16x128xf32>
    %398 = arith.mulf %397, %396 : vector<16x128xf32>
    %399 = arith.mulf %398, %396 : vector<16x128xf32>
    %400 = arith.addf %348, %399 : vector<16x128xf32>
    %c480 = arith.constant 480 : index
    %c0_287 = arith.constant 0 : index
    %401 = vector.load %arg1[%c480, %c0_287] : memref<512x128xf32, #tpu.memory_space<vmem>>, vector<16x128xf32>
    %c480_288 = arith.constant 480 : index
    %c0_289 = arith.constant 0 : index
    %402 = vector.load %arg4[%c480_288, %c0_289] : memref<512x128xf32, #tpu.memory_space<vmem>>, vector<16x128xf32>
    %403 = arith.subf %401, %402 : vector<16x128xf32>
    %c480_290 = arith.constant 480 : index
    %c0_291 = arith.constant 0 : index
    %404 = vector.load %arg2[%c480_290, %c0_291] : memref<512x128xf32, #tpu.memory_space<vmem>>, vector<16x128xf32>
    %405 = arith.mulf %404, %403 : vector<16x128xf32>
    %406 = arith.mulf %405, %403 : vector<16x128xf32>
    %407 = arith.addf %355, %406 : vector<16x128xf32>
    %c480_292 = arith.constant 480 : index
    %c0_293 = arith.constant 0 : index
    %408 = vector.load %arg5[%c480_292, %c0_293] : memref<512x128xf32, #tpu.memory_space<vmem>>, vector<16x128xf32>
    %409 = arith.subf %401, %408 : vector<16x128xf32>
    %c480_294 = arith.constant 480 : index
    %c0_295 = arith.constant 0 : index
    %410 = vector.load %arg3[%c480_294, %c0_295] : memref<512x128xf32, #tpu.memory_space<vmem>>, vector<16x128xf32>
    %411 = arith.mulf %410, %409 : vector<16x128xf32>
    %412 = arith.mulf %411, %409 : vector<16x128xf32>
    %413 = arith.addf %361, %412 : vector<16x128xf32>
    %c496 = arith.constant 496 : index
    %c0_296 = arith.constant 0 : index
    %414 = vector.load %arg1[%c496, %c0_296] : memref<512x128xf32, #tpu.memory_space<vmem>>, vector<16x128xf32>
    %c496_297 = arith.constant 496 : index
    %c0_298 = arith.constant 0 : index
    %415 = vector.load %arg4[%c496_297, %c0_298] : memref<512x128xf32, #tpu.memory_space<vmem>>, vector<16x128xf32>
    %416 = arith.subf %414, %415 : vector<16x128xf32>
    %c496_299 = arith.constant 496 : index
    %c0_300 = arith.constant 0 : index
    %417 = vector.load %arg2[%c496_299, %c0_300] : memref<512x128xf32, #tpu.memory_space<vmem>>, vector<16x128xf32>
    %418 = arith.mulf %417, %416 : vector<16x128xf32>
    %419 = arith.mulf %418, %416 : vector<16x128xf32>
    %420 = arith.addf %368, %419 : vector<16x128xf32>
    %c496_301 = arith.constant 496 : index
    %c0_302 = arith.constant 0 : index
    %421 = vector.load %arg5[%c496_301, %c0_302] : memref<512x128xf32, #tpu.memory_space<vmem>>, vector<16x128xf32>
    %422 = arith.subf %414, %421 : vector<16x128xf32>
    %c496_303 = arith.constant 496 : index
    %c0_304 = arith.constant 0 : index
    %423 = vector.load %arg3[%c496_303, %c0_304] : memref<512x128xf32, #tpu.memory_space<vmem>>, vector<16x128xf32>
    %424 = arith.mulf %423, %422 : vector<16x128xf32>
    %425 = arith.mulf %424, %422 : vector<16x128xf32>
    %426 = arith.addf %374, %425 : vector<16x128xf32>
    %c0_305 = arith.constant 0 : index
    %c0_306 = arith.constant 0 : index
    %427 = vector.load %arg8[%c0_305, %c0_306] : memref<64x128xf32, #tpu.memory_space<vmem>>, vector<16x128xf32>
    tpu.vector_store %arg8[%c0_305, %c0_306], %381 {strides = array<i32>} : memref<64x128xf32, #tpu.memory_space<vmem>>, vector<16x128xf32>,
    %c16_307 = arith.constant 16 : index
    %c0_308 = arith.constant 0 : index
    %428 = vector.load %arg8[%c16_307, %c0_308] : memref<64x128xf32, #tpu.memory_space<vmem>>, vector<16x128xf32>
    tpu.vector_store %arg8[%c16_307, %c0_308], %394 {strides = array<i32>} : memref<64x128xf32, #tpu.memory_space<vmem>>, vector<16x128xf32>,
    %c32_309 = arith.constant 32 : index
    %c0_310 = arith.constant 0 : index
    %429 = vector.load %arg8[%c32_309, %c0_310] : memref<64x128xf32, #tpu.memory_space<vmem>>, vector<16x128xf32>
    tpu.vector_store %arg8[%c32_309, %c0_310], %407 {strides = array<i32>} : memref<64x128xf32, #tpu.memory_space<vmem>>, vector<16x128xf32>,
    %c48_311 = arith.constant 48 : index
    %c0_312 = arith.constant 0 : index
    %430 = vector.load %arg8[%c48_311, %c0_312] : memref<64x128xf32, #tpu.memory_space<vmem>>, vector<16x128xf32>
    tpu.vector_store %arg8[%c48_311, %c0_312], %420 {strides = array<i32>} : memref<64x128xf32, #tpu.memory_space<vmem>>, vector<16x128xf32>,
    %c0_313 = arith.constant 0 : index
    %c0_314 = arith.constant 0 : index
    %431 = vector.load %arg9[%c0_313, %c0_314] : memref<64x128xf32, #tpu.memory_space<vmem>>, vector<16x128xf32>
    tpu.vector_store %arg9[%c0_313, %c0_314], %387 {strides = array<i32>} : memref<64x128xf32, #tpu.memory_space<vmem>>, vector<16x128xf32>,
    %c16_315 = arith.constant 16 : index
    %c0_316 = arith.constant 0 : index
    %432 = vector.load %arg9[%c16_315, %c0_316] : memref<64x128xf32, #tpu.memory_space<vmem>>, vector<16x128xf32>
    tpu.vector_store %arg9[%c16_315, %c0_316], %400 {strides = array<i32>} : memref<64x128xf32, #tpu.memory_space<vmem>>, vector<16x128xf32>,
    %c32_317 = arith.constant 32 : index
    %c0_318 = arith.constant 0 : index
    %433 = vector.load %arg9[%c32_317, %c0_318] : memref<64x128xf32, #tpu.memory_space<vmem>>, vector<16x128xf32>
    tpu.vector_store %arg9[%c32_317, %c0_318], %413 {strides = array<i32>} : memref<64x128xf32, #tpu.memory_space<vmem>>, vector<16x128xf32>,
    %c48_319 = arith.constant 48 : index
    %c0_320 = arith.constant 0 : index
    %434 = vector.load %arg9[%c48_319, %c0_320] : memref<64x128xf32, #tpu.memory_space<vmem>>, vector<16x128xf32>
    tpu.vector_store %arg9[%c48_319, %c0_320], %426 {strides = array<i32>} : memref<64x128xf32, #tpu.memory_space<vmem>>, vector<16x128xf32>,
    %c0_i32_321 = arith.constant 0 : i32
    %435 = arith.cmpi eq, %arg0, %c0_i32_321 : i32
    %436 = arith.extui %435 : i1 to i32
    %c0_i32_322 = arith.constant 0 : i32
    %437 = arith.cmpi ne, %436, %c0_i32_322 : i32
    scf.if %437 {
      %438 = arith.addf %381, %394 : vector<16x128xf32>
      %439 = arith.addf %438, %407 : vector<16x128xf32>
      %440 = arith.addf %439, %420 : vector<16x128xf32>
      %441 = vector.shape_cast %440 : vector<16x128xf32> to vector<1x16x128xf32>
      %cst = arith.constant dense<0.000000e+00> : vector<1xf32>
      %442 = vector.multi_reduction <add>, %441, %cst [1, 2] : vector<1x16x128xf32> to vector<1xf32>
      %443 = vector.shape_cast %442 : vector<1xf32> to vector<1x1x1xf32>
      %444 = vector.extract %443[0, 0, 0] : f32 from vector<1x1x1xf32>
      %c0_323 = arith.constant 0 : index
      %c0_324 = arith.constant 0 : index
      %445 = memref.load %arg6[%c0_323, %c0_324] : memref<1x1xf32, #tpu.memory_space<smem>>
      memref.store %444, %arg6[%c0_323, %c0_324] : memref<1x1xf32, #tpu.memory_space<smem>>
      %446 = arith.addf %387, %400 : vector<16x128xf32>
      %447 = arith.addf %446, %413 : vector<16x128xf32>
      %448 = arith.addf %447, %426 : vector<16x128xf32>
      %449 = vector.shape_cast %448 : vector<16x128xf32> to vector<1x16x128xf32>
      %cst_325 = arith.constant dense<0.000000e+00> : vector<1xf32>
      %450 = vector.multi_reduction <add>, %449, %cst_325 [1, 2] : vector<1x16x128xf32> to vector<1xf32>
      %451 = vector.shape_cast %450 : vector<1xf32> to vector<1x1x1xf32>
      %452 = vector.extract %451[0, 0, 0] : f32 from vector<1x1x1xf32>
      %c0_326 = arith.constant 0 : index
      %c0_327 = arith.constant 0 : index
      %453 = memref.load %arg7[%c0_326, %c0_327] : memref<1x1xf32, #tpu.memory_space<smem>>
      memref.store %452, %arg7[%c0_326, %c0_327] : memref<1x1xf32, #tpu.memory_space<smem>>
    } else {
    }
    return
  }
  func.func @transform_0(%arg0: i32) -> (i32, i32) {
    %c0_i32 = arith.constant 0 : i32
    %c0_i32_0 = arith.constant 0 : i32
    return %arg0, %c0_i32 : i32, i32
  }
  func.func @transform_1(%arg0: i32) -> (i32, i32) {
    %c0_i32 = arith.constant 0 : i32
    %c0_i32_0 = arith.constant 0 : i32
    return %arg0, %c0_i32 : i32, i32
  }
  func.func @transform_2(%arg0: i32) -> (i32, i32) {
    %c0_i32 = arith.constant 0 : i32
    %c0_i32_0 = arith.constant 0 : i32
    return %arg0, %c0_i32 : i32, i32
  }
  func.func @transform_3(%arg0: i32) -> (i32, i32) {
    %c0_i32 = arith.constant 0 : i32
    %c0_i32_0 = arith.constant 0 : i32
    return %arg0, %c0_i32 : i32, i32
  }
  func.func @transform_4(%arg0: i32) -> (i32, i32) {
    %c0_i32 = arith.constant 0 : i32
    %c0_i32_0 = arith.constant 0 : i32
    return %arg0, %c0_i32 : i32, i32
  }
  func.func @transform_5(%arg0: i32) -> (i32, i32) {
    %c0_i32 = arith.constant 0 : i32
    %c0_i32_0 = arith.constant 0 : i32
    %c0_i32_1 = arith.constant 0 : i32
    return %c0_i32, %c0_i32_0 : i32, i32
  }
  func.func @transform_6(%arg0: i32) -> (i32, i32) {
    %c0_i32 = arith.constant 0 : i32
    %c0_i32_0 = arith.constant 0 : i32
    %c0_i32_1 = arith.constant 0 : i32
    return %c0_i32, %c0_i32_0 : i32, i32
  }
}

</mosaic_0001>

<llo_original>
// kernel: _weighted_sq_diff_sums.1
$region0: #{_weighted_sq_diff_sums.1}
  #allocation0 [shape = 'u32[]', space=smem, size = 0x4, offset = 0x4, fixed_abs, tag = 'smem constant byte address 0x4 - core index']
  #allocation1 [shape = 'u32[144,128]{1,0:T(1,128)}', space=vmem, size = 0x12000, scoped, tag = 'internal scratch']
  #allocation2 [shape = 'f32[64,128]{1,0:T(8,128)}', space=vmem, size = 0x8000, scoped, tag = 'scratch operand']
  #allocation3 [shape = 'f32[64,128]{1,0:T(8,128)}', space=vmem, size = 0x8000, scoped, tag = 'scratch operand']
  %s0 = inlined_call_operand.hbm [shape: f32[512,128], index: 0, kind: input, shape index: {}]
  %s1 = inlined_call_operand.hbm [shape: f32[512,128], index: 1, kind: input, shape index: {}]
  %s2 = inlined_call_operand.hbm [shape: f32[512,128], index: 2, kind: input, shape index: {}]
  %s3 = inlined_call_operand.hbm [shape: f32[512,128], index: 3, kind: input, shape index: {}]
  %s4 = inlined_call_operand.hbm [shape: f32[512,128], index: 4, kind: input, shape index: {}]
  %s5 = inlined_call_operand.hbm [shape: f32[1,1], index: 5, kind: output, shape index: {0}]
  %s6 = inlined_call_operand.hbm [shape: f32[1,1], index: 6, kind: output, shape index: {1}]
  %7 = xla_tuple %s5, %s6
  %s8 = sld [smem:[#allocation0]]
  $region66: #{_weighted_sq_diff_sums.1} parent=0
    _
  %s10 = ssub.s32 1, %s8
  %s11 = scalar_select 0, %s10, %s8
  $region1: #{_weighted_sq_diff_sums.1} parent=0
    #allocation4 [shape = 'u8[262144]{0}', space=vmem, size = 0x40000, scoped, tag = 'input window, operand 0, single buffered']
    #allocation5 [shape = 's32[1]{0}', space=sflag, size = 0x4, scoped, tag = 'scoped memory for _weighted_sq_diff_sums.1']
    #allocation6 [shape = 's32[1]{0}', space=sflag, size = 0x4, scoped, tag = 'scoped memory for _weighted_sq_diff_sums.1']
    #allocation7 [shape = 'u8[262144]{0}', space=vmem, size = 0x40000, scoped, tag = 'input window, operand 1, single buffered']
    #allocation8 [shape = 's32[1]{0}', space=sflag, size = 0x4, scoped, tag = 'scoped memory for _weighted_sq_diff_sums.1']
    #allocation9 [shape = 'u8[262144]{0}', space=vmem, size = 0x40000, scoped, tag = 'input window, operand 2, single buffered']
    #allocation10 [shape = 'u8[262144]{0}', space=vmem, size = 0x40000, scoped, tag = 'input window, operand 3, single buffered']
    #allocation11 [shape = 's32[1]{0}', space=sflag, size = 0x4, scoped, tag = 'scoped memory for _weighted_sq_diff_sums.1']
    #allocation12 [shape = 'u8[262144]{0}', space=vmem, size = 0x40000, scoped, tag = 'input window, operand 4, single buffered']
    #allocation13 [shape = 'u8[512]{0}', space=smem, size = 0x200, scoped, tag = 'output window, operand 0, single buffered']
    #allocation14 [shape = 'u8[512]{0}', space=smem, size = 0x200, scoped, tag = 'output window, operand 1, single buffered']
    #allocation15 [shape = 's32[1]{0}', space=sflag, size = 0x4, scoped, tag = 'scoped memory for _weighted_sq_diff_sums.1']
    %12 = vsyncpa [#allocation5], 0
    %13 = vsyncpa [#allocation8], 0
    %14 = vsyncpa [#allocation11], 0
    %15 = vsyncpa [#allocation6], 0
    %16 = vsyncpa [#allocation15], 0
    // Predicated region
    $region2: #{_weighted_sq_diff_sums.1} parent=1 // pred_check
      _
    $region3: #{_weighted_sq_diff_sums.1} parent=1 // pred_check_branch
      %18 = sbr.rel (0) target = $region5
    $region4: #{_weighted_sq_diff_sums.1} parent=1 // pred_region
      %s20 = ssub.s32 8192, 8192
      %21 = vsyncadd [#allocation5], %s20
      %s22 = sshll.u32 [#allocation4], 4
      %s23 = int_to_ptr.vmem [resolvable:$true] %s22
      %28 = dma.hbm_to_vmem [thread:$0]  %s0, 8192, %s23, [#allocation5], 128, 128, 8
    $region5: #{_weighted_sq_diff_sums.1} parent=1 // pred_fallthru
      _
    // Predicated region
    $region6: #{_weighted_sq_diff_sums.1} parent=1 // pred_check
      _
    $region7: #{_weighted_sq_diff_sums.1} parent=1 // pred_check_branch
      %30 = sbr.rel (0) target = $region9
    $region8: #{_weighted_sq_diff_sums.1} parent=1 // pred_region
      %s32 = ssub.s32 8192, 8192
      %33 = vsyncadd [#allocation8], %s32
      %s34 = sshll.u32 [#allocation7], 4
      %s35 = int_to_ptr.vmem [resolvable:$true] %s34
      %40 = dma.hbm_to_vmem [thread:$0]  %s1, 8192, %s35, [#allocation8], 128, 128, 8
    $region9: #{_weighted_sq_diff_sums.1} parent=1 // pred_fallthru
      _
    // Predicated region
    $region10: #{_weighted_sq_diff_sums.1} parent=1 // pred_check
      _
    $region11: #{_weighted_sq_diff_sums.1} parent=1 // pred_check_branch
      %42 = sbr.rel (0) target = $region13
    $region12: #{_weighted_sq_diff_sums.1} parent=1 // pred_region
      %s44 = ssub.s32 8192, 8192
      %45 = vsyncadd [#allocation8], %s44
      %s46 = sshll.u32 [#allocation9], 4
      %s47 = int_to_ptr.vmem [resolvable:$true] %s46
      %52 = dma.hbm_to_vmem [thread:$0]  %s2, 8192, %s47, [#allocation8], 128, 128, 8
    $region13: #{_weighted_sq_diff_sums.1} parent=1 // pred_fallthru
      _
    // Predicated region
    $region14: #{_weighted_sq_diff_sums.1} parent=1 // pred_check
      _
    $region15: #{_weighted_sq_diff_sums.1} parent=1 // pred_check_branch
      %54 = sbr.rel (0) target = $region17
    $region16: #{_weighted_sq_diff_sums.1} parent=1 // pred_region
      %s56 = ssub.s32 8192, 8192
      %57 = vsyncadd [#allocation11], %s56
      %s58 = sshll.u32 [#allocation10], 4
      %s59 = int_to_ptr.vmem [resolvable:$true] %s58
      %64 = dma.hbm_to_vmem [thread:$0]  %s3, 8192, %s59, [#allocation11], 128, 128, 8
    $region17: #{_weighted_sq_diff_sums.1} parent=1 // pred_fallthru
      _
    // Predicated region
    $region18: #{_weighted_sq_diff_sums.1} parent=1 // pred_check
      _
    $region19: #{_weighted_sq_diff_sums.1} parent=1 // pred_check_branch
      %66 = sbr.rel (0) target = $region21
    $region20: #{_weighted_sq_diff_sums.1} parent=1 // pred_region
      %s68 = ssub.s32 8192, 8192
      %69 = vsyncadd [#allocation11], %s68
      %s70 = sshll.u32 [#allocation12], 4
      %s71 = int_to_ptr.vmem [resolvable:$true] %s70
      %76 = dma.hbm_to_vmem [thread:$0]  %s4, 8192, %s71, [#allocation11], 128, 128, 8
    $region21: #{_weighted_sq_diff_sums.1} parent=1 // pred_fallthru
      _
    // Predicated region
    $region22: #{_weighted_sq_diff_sums.1} parent=1 // pred_check
      _
    $region23: #{_weighted_sq_diff_sums.1} parent=1 // pred_check_branch
      %78 = sbr.rel (0) target = $region25
    $region24: #{_weighted_sq_diff_sums.1} parent=1 // pred_region
      %79 = dma.done [#allocation5], 8192
    $region25: #{_weighted_sq_diff_sums.1} parent=1 // pred_fallthru
      _
    // Predicated region
    $region26: #{_weighted_sq_diff_sums.1} parent=1 // pred_check
      _
    $region27: #{_weighted_sq_diff_sums.1} parent=1 // pred_check_branch
      %81 = sbr.rel (0) target = $region29
    $region28: #{_weighted_sq_diff_sums.1} parent=1 // pred_region
      %82 = dma.done [#allocation8], 8192
    $region29: #{_weighted_sq_diff_sums.1} parent=1 // pred_fallthru
      _
    // Predicated region
    $region30: #{_weighted_sq_diff_sums.1} parent=1 // pred_check
      _
    $region31: #{_weighted_sq_diff_sums.1} parent=1 // pred_check_branch
      %84 = sbr.rel (0) target = $region33
    $region32: #{_weighted_sq_diff_sums.1} parent=1 // pred_region
      %85 = dma.done [#allocation8], 8192
    $region33: #{_weighted_sq_diff_sums.1} parent=1 // pred_fallthru
      _
    // Predicated region
    $region34: #{_weighted_sq_diff_sums.1} parent=1 // pred_check
      _
    $region35: #{_weighted_sq_diff_sums.1} parent=1 // pred_check_branch
      %87 = sbr.rel (0) target = $region37
    $region36: #{_weighted_sq_diff_sums.1} parent=1 // pred_region
      %88 = dma.done [#allocation11], 8192
    $region37: #{_weighted_sq_diff_sums.1} parent=1 // pred_fallthru
      _
    // Predicated region
    $region38: #{_weighted_sq_diff_sums.1} parent=1 // pred_check
      _
    $region39: #{_weighted_sq_diff_sums.1} parent=1 // pred_check_branch
      %90 = sbr.rel (0) target = $region41
    $region40: #{_weighted_sq_diff_sums.1} parent=1 // pred_region
      %91 = dma.done [#allocation11], 8192
    $region41: #{_weighted_sq_diff_sums.1} parent=1 // pred_fallthru
      _
    %p92 = scmp.eq.s32.totalorder 0, 0
    // Predicated region
    $region42: #{_weighted_sq_diff_sums.1} parent=1 // pred_check
      %p93 = pneg %p92
    $region43: #{_weighted_sq_diff_sums.1} parent=1 // pred_check_branch
      %95 = sbr.rel (%p93) target = $region45
    $region44: #{_weighted_sq_diff_sums.1} parent=1 // pred_region
      %96 = vst [vmem:[#allocation2] sm:$0xff] 0.0
      %97 = vst [vmem:[#allocation2 + $0x8] sm:$0xff] 0.0
      %98 = vst [vmem:[#allocation2 + $0x10] sm:$0xff] 0.0
      %99 = vst [vmem:[#allocation2 + $0x18] sm:$0xff] 0.0
      %100 = vst [vmem:[#allocation2 + $0x20] sm:$0xff] 0.0
      %101 = vst [vmem:[#allocation2 + $0x28] sm:$0xff] 0.0
      %102 = vst [vmem:[#allocation2 + $0x30] sm:$0xff] 0.0
      %103 = vst [vmem:[#allocation2 + $0x38] sm:$0xff] 0.0
      %104 = vst [vmem:[#allocation3] sm:$0xff] 0.0
      %105 = vst [vmem:[#allocation3 + $0x8] sm:$0xff] 0.0
      %106 = vst [vmem:[#allocation3 + $0x10] sm:$0xff] 0.0
      %107 = vst [vmem:[#allocation3 + $0x18] sm:$0xff] 0.0
      %108 = vst [vmem:[#allocation3 + $0x20] sm:$0xff] 0.0
      %109 = vst [vmem:[#allocation3 + $0x28] sm:$0xff] 0.0
      %110 = vst [vmem:[#allocation3 + $0x30] sm:$0xff] 0.0
      %111 = vst [vmem:[#allocation3 + $0x38] sm:$0xff] 0.0
    $region45: #{_weighted_sq_diff_sums.1} parent=1 // pred_fallthru
      _
    %v112 = vld [vmem:[#allocation2] sm:$0xff]
    %v113 = vld [vmem:[#allocation2 + $0x8] sm:$0xff]
    %v114 = vld [vmem:[#allocation2 + $0x10] sm:$0xff]
    %v115 = vld [vmem:[#allocation2 + $0x18] sm:$0xff]
    %v116 = vld [vmem:[#allocation2 + $0x20] sm:$0xff]
    %v117 = vld [vmem:[#allocation2 + $0x28] sm:$0xff]
    %v118 = vld [vmem:[#allocation2 + $0x30] sm:$0xff]
    %v119 = vld [vmem:[#allocation2 + $0x38] sm:$0xff]
    %v120 = vld [vmem:[#allocation3] sm:$0xff]
    %v121 = vld [vmem:[#allocation3 + $0x8] sm:$0xff]
    %v122 = vld [vmem:[#allocation3 + $0x10] sm:$0xff]
    %v123 = vld [vmem:[#allocation3 + $0x18] sm:$0xff]
    %v124 = vld [vmem:[#allocation3 + $0x20] sm:$0xff]
    %v125 = vld [vmem:[#allocation3 + $0x28] sm:$0xff]
    %v126 = vld [vmem:[#allocation3 + $0x30] sm:$0xff]
    %v127 = vld [vmem:[#allocation3 + $0x38] sm:$0xff]
    %v128 = vld [vmem:[#allocation4] sm:$0xff]
    %v129 = vld [vmem:[#allocation4 + $0x8] sm:$0xff]
    %v130 = vld [vmem:[#allocation10] sm:$0xff]
    %v131 = vld [vmem:[#allocation10 + $0x8] sm:$0xff]
    %v132 = vsub.f32 %v128, %v130
    %v133 = vsub.f32 %v129, %v131
    %v134 = vld [vmem:[#allocation7] sm:$0xff]
    %v135 = vld [vmem:[#allocation7 + $0x8] sm:$0xff]
    %v136 = vmul.f32 %v134, %v132
    %v137 = vmul.f32 %v135, %v133
    %v138 = vmul.f32 %v136, %v132
    %v139 = vmul.f32 %v137, %v133
    %v140 = vadd.f32 %v112, %v138
    %v141 = vadd.f32 %v113, %v139
    %v142 = vld [vmem:[#allocation12] sm:$0xff]
    %v143 = vld [vmem:[#allocation12 + $0x8] sm:$0xff]
    %v144 = vsub.f32 %v128, %v142
    %v145 = vsub.f32 %v129, %v143
    %v146 = vld [vmem:[#allocation9] sm:$0xff]
    %v147 = vld [vmem:[#allocation9 + $0x8] sm:$0xff]
    %v148 = vmul.f32 %v146, %v144
    %v149 = vmul.f32 %v147, %v145
    %v150 = vmul.f32 %v148, %v144
    %v151 = vmul.f32 %v149, %v145
    %v152 = vadd.f32 %v120, %v150
    %v153 = vadd.f32 %v121, %v151
    %v154 = vld [vmem:[#allocation4 + $0x10] sm:$0xff]
    %v155 = vld [vmem:[#allocation4 + $0x18] sm:$0xff]
    %v156 = vld [vmem:[#allocation10 + $0x10] sm:$0xff]
    %v157 = vld [vmem:[#allocation10 + $0x18] sm:$0xff]
    %v158 = vsub.f32 %v154, %v156
    %v159 = vsub.f32 %v155, %v157
    %v160 = vld [vmem:[#allocation7 + $0x10] sm:$0xff]
    %v161 = vld [vmem:[#allocation7 + $0x18] sm:$0xff]
    %v162 = vmul.f32 %v160, %v158
    %v163 = vmul.f32 %v161, %v159
    %v164 = vmul.f32 %v162, %v158
    %v165 = vmul.f32 %v163, %v159
    %v166 = vadd.f32 %v114, %v164
    %v167 = vadd.f32 %v115, %v165
    %v168 = vld [vmem:[#allocation12 + $0x10] sm:$0xff]
    %v169 = vld [vmem:[#allocation12 + $0x18] sm:$0xff]
    %v170 = vsub.f32 %v154, %v168
    %v171 = vsub.f32 %v155, %v169
    %v172 = vld [vmem:[#allocation9 + $0x10] sm:$0xff]
    %v173 = vld [vmem:[#allocation9 + $0x18] sm:$0xff]
    %v174 = vmul.f32 %v172, %v170
    %v175 = vmul.f32 %v173, %v171
    %v176 = vmul.f32 %v174, %v170
    %v177 = vmul.f32 %v175, %v171
    %v178 = vadd.f32 %v122, %v176
    %v179 = vadd.f32 %v123, %v177
    %v180 = vld [vmem:[#allocation4 + $0x20] sm:$0xff]
    %v181 = vld [vmem:[#allocation4 + $0x28] sm:$0xff]
    %v182 = vld [vmem:[#allocation10 + $0x20] sm:$0xff]
    %v183 = vld [vmem:[#allocation10 + $0x28] sm:$0xff]
    %v184 = vsub.f32 %v180, %v182
    %v185 = vsub.f32 %v181, %v183
    %v186 = vld [vmem:[#allocation7 + $0x20] sm:$0xff]
    %v187 = vld [vmem:[#allocation7 + $0x28] sm:$0xff]
    %v188 = vmul.f32 %v186, %v184
    %v189 = vmul.f32 %v187, %v185
    %v190 = vmul.f32 %v188, %v184
    %v191 = vmul.f32 %v189, %v185
    %v192 = vadd.f32 %v116, %v190
    %v193 = vadd.f32 %v117, %v191
    %v194 = vld [vmem:[#allocation12 + $0x20] sm:$0xff]
    %v195 = vld [vmem:[#allocation12 + $0x28] sm:$0xff]
    %v196 = vsub.f32 %v180, %v194
    %v197 = vsub.f32 %v181, %v195
    %v198 = vld [vmem:[#allocation9 + $0x20] sm:$0xff]
    %v199 = vld [vmem:[#allocation9 + $0x28] sm:$0xff]
    %v200 = vmul.f32 %v198, %v196
    %v201 = vmul.f32 %v199, %v197
    %v202 = vmul.f32 %v200, %v196
    %v203 = vmul.f32 %v201, %v197
    %v204 = vadd.f32 %v124, %v202
    %v205 = vadd.f32 %v125, %v203
    %v206 = vld [vmem:[#allocation4 + $0x30] sm:$0xff]
    %v207 = vld [vmem:[#allocation4 + $0x38] sm:$0xff]
    %v208 = vld [vmem:[#allocation10 + $0x30] sm:$0xff]
    %v209 = vld [vmem:[#allocation10 + $0x38] sm:$0xff]
    %v210 = vsub.f32 %v206, %v208
    %v211 = vsub.f32 %v207, %v209
    %v212 = vld [vmem:[#allocation7 + $0x30] sm:$0xff]
    %v213 = vld [vmem:[#allocation7 + $0x38] sm:$0xff]
    %v214 = vmul.f32 %v212, %v210
    %v215 = vmul.f32 %v213, %v211
    %v216 = vmul.f32 %v214, %v210
    %v217 = vmul.f32 %v215, %v211
    %v218 = vadd.f32 %v118, %v216
    %v219 = vadd.f32 %v119, %v217
    %v220 = vld [vmem:[#allocation12 + $0x30] sm:$0xff]
    %v221 = vld [vmem:[#allocation12 + $0x38] sm:$0xff]
    %v222 = vsub.f32 %v206, %v220
    %v223 = vsub.f32 %v207, %v221
    %v224 = vld [vmem:[#allocation9 + $0x30] sm:$0xff]
    %v225 = vld [vmem:[#allocation9 + $0x38] sm:$0xff]
    %v226 = vmul.f32 %v224, %v222
    %v227 = vmul.f32 %v225, %v223
    %v228 = vmul.f32 %v226, %v222
    %v229 = vmul.f32 %v227, %v223
    %v230 = vadd.f32 %v126, %v228
    %v231 = vadd.f32 %v127, %v229
    %v232 = vld [vmem:[#allocation4 + $0x40] sm:$0xff]
    %v233 = vld [vmem:[#allocation4 + $0x48] sm:$0xff]
    %v234 = vld [vmem:[#allocation10 + $0x40] sm:$0xff]
    %v235 = vld [vmem:[#allocation10 + $0x48] sm:$0xff]
    %v236 = vsub.f32 %v232, %v234
    %v237 = vsub.f32 %v233, %v235
    %v238 = vld [vmem:[#allocation7 + $0x40] sm:$0xff]
    %v239 = vld [vmem:[#allocation7 + $0x48] sm:$0xff]
    %v240 = vmul.f32 %v238, %v236
    %v241 = vmul.f32 %v239, %v237
    %v242 = vmul.f32 %v240, %v236
    %v243 = vmul.f32 %v241, %v237
    %v244 = vadd.f32 %v140, %v242
    %v245 = vadd.f32 %v141, %v243
    %v246 = vld [vmem:[#allocation12 + $0x40] sm:$0xff]
    %v247 = vld [vmem:[#allocation12 + $0x48] sm:$0xff]
    %v248 = vsub.f32 %v232, %v246
    %v249 = vsub.f32 %v233, %v247
    %v250 = vld [vmem:[#allocation9 + $0x40] sm:$0xff]
    %v251 = vld [vmem:[#allocation9 + $0x48] sm:$0xff]
    %v252 = vmul.f32 %v250, %v248
    %v253 = vmul.f32 %v251, %v249
    %v254 = vmul.f32 %v252, %v248
    %v255 = vmul.f32 %v253, %v249
    %v256 = vadd.f32 %v152, %v254
    %v257 = vadd.f32 %v153, %v255
    %v258 = vld [vmem:[#allocation4 + $0x50] sm:$0xff]
    %v259 = vld [vmem:[#allocation4 + $0x58] sm:$0xff]
    %v260 = vld [vmem:[#allocation10 + $0x50] sm:$0xff]
    %v261 = vld [vmem:[#allocation10 + $0x58] sm:$0xff]
    %v262 = vsub.f32 %v258, %v260
    %v263 = vsub.f32 %v259, %v261
    %v264 = vld [vmem:[#allocation7 + $0x50] sm:$0xff]
    %v265 = vld [vmem:[#allocation7 + $0x58] sm:$0xff]
    %v266 = vmul.f32 %v264, %v262
    %v267 = vmul.f32 %v265, %v263
    %v268 = vmul.f32 %v266, %v262
    %v269 = vmul.f32 %v267, %v263
    %v270 = vadd.f32 %v166, %v268
    %v271 = vadd.f32 %v167, %v269
    %v272 = vld [vmem:[#allocation12 + $0x50] sm:$0xff]
    %v273 = vld [vmem:[#allocation12 + $0x58] sm:$0xff]
    %v274 = vsub.f32 %v258, %v272
    %v275 = vsub.f32 %v259, %v273
    %v276 = vld [vmem:[#allocation9 + $0x50] sm:$0xff]
    %v277 = vld [vmem:[#allocation9 + $0x58] sm:$0xff]
    %v278 = vmul.f32 %v276, %v274
    %v279 = vmul.f32 %v277, %v275
    %v280 = vmul.f32 %v278, %v274
    %v281 = vmul.f32 %v279, %v275
    %v282 = vadd.f32 %v178, %v280
    %v283 = vadd.f32 %v179, %v281
    %v284 = vld [vmem:[#allocation4 + $0x60] sm:$0xff]
    %v285 = vld [vmem:[#allocation4 + $0x68] sm:$0xff]
    %v286 = vld [vmem:[#allocation10 + $0x60] sm:$0xff]
    %v287 = vld [vmem:[#allocation10 + $0x68] sm:$0xff]
    %v288 = vsub.f32 %v284, %v286
    %v289 = vsub.f32 %v285, %v287
    %v290 = vld [vmem:[#allocation7 + $0x60] sm:$0xff]
    %v291 = vld [vmem:[#allocation7 + $0x68] sm:$0xff]
    %v292 = vmul.f32 %v290, %v288
    %v293 = vmul.f32 %v291, %v289
    %v294 = vmul.f32 %v292, %v288
    %v295 = vmul.f32 %v293, %v289
    %v296 = vadd.f32 %v192, %v294
    %v297 = vadd.f32 %v193, %v295
    %v298 = vld [vmem:[#allocation12 + $0x60] sm:$0xff]
    %v299 = vld [vmem:[#allocation12 + $0x68] sm:$0xff]
    %v300 = vsub.f32 %v284, %v298
    %v301 = vsub.f32 %v285, %v299
    %v302 = vld [vmem:[#allocation9 + $0x60] sm:$0xff]
    %v303 = vld [vmem:[#allocation9 + $0x68] sm:$0xff]
    %v304 = vmul.f32 %v302, %v300
    %v305 = vmul.f32 %v303, %v301
    %v306 = vmul.f32 %v304, %v300
    %v307 = vmul.f32 %v305, %v301
    %v308 = vadd.f32 %v204, %v306
    %v309 = vadd.f32 %v205, %v307
    %v310 = vld [vmem:[#allocation4 + $0x70] sm:$0xff]
    %v311 = vld [vmem:[#allocation4 + $0x78] sm:$0xff]
    %v312 = vld [vmem:[#allocation10 + $0x70] sm:$0xff]
    %v313 = vld [vmem:[#allocation10 + $0x78] sm:$0xff]
    %v314 = vsub.f32 %v310, %v312
    %v315 = vsub.f32 %v311, %v313
    %v316 = vld [vmem:[#allocation7 + $0x70] sm:$0xff]
    %v317 = vld [vmem:[#allocation7 + $0x78] sm:$0xff]
    %v318 = vmul.f32 %v316, %v314
    %v319 = vmul.f32 %v317, %v315
    %v320 = vmul.f32 %v318, %v314
    %v321 = vmul.f32 %v319, %v315
    %v322 = vadd.f32 %v218, %v320
    %v323 = vadd.f32 %v219, %v321
    %v324 = vld [vmem:[#allocation12 + $0x70] sm:$0xff]
    %v325 = vld [vmem:[#allocation12 + $0x78] sm:$0xff]
    %v326 = vsub.f32 %v310, %v324
    %v327 = vsub.f32 %v311, %v325
    %v328 = vld [vmem:[#allocation9 + $0x70] sm:$0xff]
    %v329 = vld [vmem:[#allocation9 + $0x78] sm:$0xff]
    %v330 = vmul.f32 %v328, %v326
    %v331 = vmul.f32 %v329, %v327
    %v332 = vmul.f32 %v330, %v326
    %v333 = vmul.f32 %v331, %v327
    %v334 = vadd.f32 %v230, %v332
    %v335 = vadd.f32 %v231, %v333
    %v336 = vld [vmem:[#allocation4 + $0x80] sm:$0xff]
    %v337 = vld [vmem:[#allocation4 + $0x88] sm:$0xff]
    %v338 = vld [vmem:[#allocation10 + $0x80] sm:$0xff]
    %v339 = vld [vmem:[#allocation10 + $0x88] sm:$0xff]
    %v340 = vsub.f32 %v336, %v338
    %v341 = vsub.f32 %v337, %v339
    %v342 = vld [vmem:[#allocation7 + $0x80] sm:$0xff]
    %v343 = vld [vmem:[#allocation7 + $0x88] sm:$0xff]
    %v344 = vmul.f32 %v342, %v340
    %v345 = vmul.f32 %v343, %v341
    %v346 = vmul.f32 %v344, %v340
    %v347 = vmul.f32 %v345, %v341
    %v348 = vadd.f32 %v244, %v346
    %v349 = vadd.f32 %v245, %v347
    %v350 = vld [vmem:[#allocation12 + $0x80] sm:$0xff]
    %v351 = vld [vmem:[#allocation12 + $0x88] sm:$0xff]
    %v352 = vsub.f32 %v336, %v350
    %v353 = vsub.f32 %v337, %v351
    %v354 = vld [vmem:[#allocation9 + $0x80] sm:$0xff]
    %v355 = vld [vmem:[#allocation9 + $0x88] sm:$0xff]
    %v356 = vmul.f32 %v354, %v352
    %v357 = vmul.f32 %v355, %v353
    %v358 = vmul.f32 %v356, %v352
    %v359 = vmul.f32 %v357, %v353
    %v360 = vadd.f32 %v256, %v358
    %v361 = vadd.f32 %v257, %v359
    %v362 = vld [vmem:[#allocation4 + $0x90] sm:$0xff]
    %v363 = vld [vmem:[#allocation4 + $0x98] sm:$0xff]
    %v364 = vld [vmem:[#allocation10 + $0x90] sm:$0xff]
    %v365 = vld [vmem:[#allocation10 + $0x98] sm:$0xff]
    %v366 = vsub.f32 %v362, %v364
    %v367 = vsub.f32 %v363, %v365
    %v368 = vld [vmem:[#allocation7 + $0x90] sm:$0xff]
    %v369 = vld [vmem:[#allocation7 + $0x98] sm:$0xff]
    %v370 = vmul.f32 %v368, %v366
    %v371 = vmul.f32 %v369, %v367
    %v372 = vmul.f32 %v370, %v366
    %v373 = vmul.f32 %v371, %v367
    %v374 = vadd.f32 %v270, %v372
    %v375 = vadd.f32 %v271, %v373
    %v376 = vld [vmem:[#allocation12 + $0x90] sm:$0xff]
    %v377 = vld [vmem:[#allocation12 + $0x98] sm:$0xff]
    %v378 = vsub.f32 %v362, %v376
    %v379 = vsub.f32 %v363, %v377
    %v380 = vld [vmem:[#allocation9 + $0x90] sm:$0xff]
    %v381 = vld [vmem:[#allocation9 + $0x98] sm:$0xff]
    %v382 = vmul.f32 %v380, %v378
    %v383 = vmul.f32 %v381, %v379
    %v384 = vmul.f32 %v382, %v378
    %v385 = vmul.f32 %v383, %v379
    %v386 = vadd.f32 %v282, %v384
    %v387 = vadd.f32 %v283, %v385
    %v388 = vld [vmem:[#allocation4 + $0xa0] sm:$0xff]
    %v389 = vld [vmem:[#allocation4 + $0xa8] sm:$0xff]
    %v390 = vld [vmem:[#allocation10 + $0xa0] sm:$0xff]
    %v391 = vld [vmem:[#allocation10 + $0xa8] sm:$0xff]
    %v392 = vsub.f32 %v388, %v390
    %v393 = vsub.f32 %v389, %v391
    %v394 = vld [vmem:[#allocation7 + $0xa0] sm:$0xff]
    %v395 = vld [vmem:[#allocation7 + $0xa8] sm:$0xff]
    %v396 = vmul.f32 %v394, %v392
    %v397 = vmul.f32 %v395, %v393
    %v398 = vmul.f32 %v396, %v392
    %v399 = vmul.f32 %v397, %v393
    %v400 = vadd.f32 %v296, %v398
    %v401 = vadd.f32 %v297, %v399
    %v402 = vld [vmem:[#allocation12 + $0xa0] sm:$0xff]
    %v403 = vld [vmem:[#allocation12 + $0xa8] sm:$0xff]
    %v404 = vsub.f32 %v388, %v402
    %v405 = vsub.f32 %v389, %v403
    %v406 = vld [vmem:[#allocation9 + $0xa0] sm:$0xff]
    %v407 = vld [vmem:[#allocation9 + $0xa8] sm:$0xff]
    %v408 = vmul.f32 %v406, %v404
    %v409 = vmul.f32 %v407, %v405
    %v410 = vmul.f32 %v408, %v404
    %v411 = vmul.f32 %v409, %v405
    %v412 = vadd.f32 %v308, %v410
    %v413 = vadd.f32 %v309, %v411
    %v414 = vld [vmem:[#allocation4 + $0xb0] sm:$0xff]
    %v415 = vld [vmem:[#allocation4 + $0xb8] sm:$0xff]
    %v416 = vld [vmem:[#allocation10 + $0xb0] sm:$0xff]
    %v417 = vld [vmem:[#allocation10 + $0xb8] sm:$0xff]
    %v418 = vsub.f32 %v414, %v416
    %v419 = vsub.f32 %v415, %v417
    %v420 = vld [vmem:[#allocation7 + $0xb0] sm:$0xff]
    %v421 = vld [vmem:[#allocation7 + $0xb8] sm:$0xff]
    %v422 = vmul.f32 %v420, %v418
    %v423 = vmul.f32 %v421, %v419
    %v424 = vmul.f32 %v422, %v418
    %v425 = vmul.f32 %v423, %v419
    %v426 = vadd.f32 %v322, %v424
    %v427 = vadd.f32 %v323, %v425
    %v428 = vld [vmem:[#allocation12 + $0xb0] sm:$0xff]
    %v429 = vld [vmem:[#allocation12 + $0xb8] sm:$0xff]
    %v430 = vsub.f32 %v414, %v428
    %v431 = vsub.f32 %v415, %v429
    %v432 = vld [vmem:[#allocation9 + $0xb0] sm:$0xff]
    %v433 = vld [vmem:[#allocation9 + $0xb8] sm:$0xff]
    %v434 = vmul.f32 %v432, %v430
    %v435 = vmul.f32 %v433, %v431
    %v436 = vmul.f32 %v434, %v430
    %v437 = vmul.f32 %v435, %v431
    %v438 = vadd.f32 %v334, %v436
    %v439 = vadd.f32 %v335, %v437
    %v440 = vld [vmem:[#allocation4 + $0xc0] sm:$0xff]
    %v441 = vld [vmem:[#allocation4 + $0xc8] sm:$0xff]
    %v442 = vld [vmem:[#allocation10 + $0xc0] sm:$0xff]
    %v443 = vld [vmem:[#allocation10 + $0xc8] sm:$0xff]
    %v444 = vsub.f32 %v440, %v442
    %v445 = vsub.f32 %v441, %v443
    %v446 = vld [vmem:[#allocation7 + $0xc0] sm:$0xff]
    %v447 = vld [vmem:[#allocation7 + $0xc8] sm:$0xff]
    %v448 = vmul.f32 %v446, %v444
    %v449 = vmul.f32 %v447, %v445
    %v450 = vmul.f32 %v448, %v444
    %v451 = vmul.f32 %v449, %v445
    %v452 = vadd.f32 %v348, %v450
    %v453 = vadd.f32 %v349, %v451
    %v454 = vld [vmem:[#allocation12 + $0xc0] sm:$0xff]
    %v455 = vld [vmem:[#allocation12 + $0xc8] sm:$0xff]
    %v456 = vsub.f32 %v440, %v454
    %v457 = vsub.f32 %v441, %v455
    %v458 = vld [vmem:[#allocation9 + $0xc0] sm:$0xff]
    %v459 = vld [vmem:[#allocation9 + $0xc8] sm:$0xff]
    %v460 = vmul.f32 %v458, %v456
    %v461 = vmul.f32 %v459, %v457
    %v462 = vmul.f32 %v460, %v456
    %v463 = vmul.f32 %v461, %v457
    %v464 = vadd.f32 %v360, %v462
    %v465 = vadd.f32 %v361, %v463
    %v466 = vld [vmem:[#allocation4 + $0xd0] sm:$0xff]
    %v467 = vld [vmem:[#allocation4 + $0xd8] sm:$0xff]
    %v468 = vld [vmem:[#allocation10 + $0xd0] sm:$0xff]
    %v469 = vld [vmem:[#allocation10 + $0xd8] sm:$0xff]
    %v470 = vsub.f32 %v466, %v468
    %v471 = vsub.f32 %v467, %v469
    %v472 = vld [vmem:[#allocation7 + $0xd0] sm:$0xff]
    %v473 = vld [vmem:[#allocation7 + $0xd8] sm:$0xff]
    %v474 = vmul.f32 %v472, %v470
    %v475 = vmul.f32 %v473, %v471
    %v476 = vmul.f32 %v474, %v470
    %v477 = vmul.f32 %v475, %v471
    %v478 = vadd.f32 %v374, %v476
    %v479 = vadd.f32 %v375, %v477
    %v480 = vld [vmem:[#allocation12 + $0xd0] sm:$0xff]
    %v481 = vld [vmem:[#allocation12 + $0xd8] sm:$0xff]
    %v482 = vsub.f32 %v466, %v480
    %v483 = vsub.f32 %v467, %v481
    %v484 = vld [vmem:[#allocation9 + $0xd0] sm:$0xff]
    %v485 = vld [vmem:[#allocation9 + $0xd8] sm:$0xff]
    %v486 = vmul.f32 %v484, %v482
    %v487 = vmul.f32 %v485, %v483
    %v488 = vmul.f32 %v486, %v482
    %v489 = vmul.f32 %v487, %v483
    %v490 = vadd.f32 %v386, %v488
    %v491 = vadd.f32 %v387, %v489
    %v492 = vld [vmem:[#allocation4 + $0xe0] sm:$0xff]
    %v493 = vld [vmem:[#allocation4 + $0xe8] sm:$0xff]
    %v494 = vld [vmem:[#allocation10 + $0xe0] sm:$0xff]
    %v495 = vld [vmem:[#allocation10 + $0xe8] sm:$0xff]
    %v496 = vsub.f32 %v492, %v494
    %v497 = vsub.f32 %v493, %v495
    %v498 = vld [vmem:[#allocation7 + $0xe0] sm:$0xff]
    %v499 = vld [vmem:[#allocation7 + $0xe8] sm:$0xff]
    %v500 = vmul.f32 %v498, %v496
    %v501 = vmul.f32 %v499, %v497
    %v502 = vmul.f32 %v500, %v496
    %v503 = vmul.f32 %v501, %v497
    %v504 = vadd.f32 %v400, %v502
    %v505 = vadd.f32 %v401, %v503
    %v506 = vld [vmem:[#allocation12 + $0xe0] sm:$0xff]
    %v507 = vld [vmem:[#allocation12 + $0xe8] sm:$0xff]
    %v508 = vsub.f32 %v492, %v506
    %v509 = vsub.f32 %v493, %v507
    %v510 = vld [vmem:[#allocation9 + $0xe0] sm:$0xff]
    %v511 = vld [vmem:[#allocation9 + $0xe8] sm:$0xff]
    %v512 = vmul.f32 %v510, %v508
    %v513 = vmul.f32 %v511, %v509
    %v514 = vmul.f32 %v512, %v508
    %v515 = vmul.f32 %v513, %v509
    %v516 = vadd.f32 %v412, %v514
    %v517 = vadd.f32 %v413, %v515
    %v518 = vld [vmem:[#allocation4 + $0xf0] sm:$0xff]
    %v519 = vld [vmem:[#allocation4 + $0xf8] sm:$0xff]
    %v520 = vld [vmem:[#allocation10 + $0xf0] sm:$0xff]
    %v521 = vld [vmem:[#allocation10 + $0xf8] sm:$0xff]
    %v522 = vsub.f32 %v518, %v520
    %v523 = vsub.f32 %v519, %v521
    %v524 = vld [vmem:[#allocation7 + $0xf0] sm:$0xff]
    %v525 = vld [vmem:[#allocation7 + $0xf8] sm:$0xff]
    %v526 = vmul.f32 %v524, %v522
    %v527 = vmul.f32 %v525, %v523
    %v528 = vmul.f32 %v526, %v522
    %v529 = vmul.f32 %v527, %v523
    %v530 = vadd.f32 %v426, %v528
    %v531 = vadd.f32 %v427, %v529
    %v532 = vld [vmem:[#allocation12 + $0xf0] sm:$0xff]
    %v533 = vld [vmem:[#allocation12 + $0xf8] sm:$0xff]
    %v534 = vsub.f32 %v518, %v532
    %v535 = vsub.f32 %v519, %v533
    %v536 = vld [vmem:[#allocation9 + $0xf0] sm:$0xff]
    %v537 = vld [vmem:[#allocation9 + $0xf8] sm:$0xff]
    %v538 = vmul.f32 %v536, %v534
    %v539 = vmul.f32 %v537, %v535
    %v540 = vmul.f32 %v538, %v534
    %v541 = vmul.f32 %v539, %v535
    %v542 = vadd.f32 %v438, %v540
    %v543 = vadd.f32 %v439, %v541
    %v544 = vld [vmem:[#allocation4 + $0x100] sm:$0xff]
    %v545 = vld [vmem:[#allocation4 + $0x108] sm:$0xff]
    %v546 = vld [vmem:[#allocation10 + $0x100] sm:$0xff]
    %v547 = vld [vmem:[#allocation10 + $0x108] sm:$0xff]
    %v548 = vsub.f32 %v544, %v546
    %v549 = vsub.f32 %v545, %v547
    %v550 = vld [vmem:[#allocation7 + $0x100] sm:$0xff]
    %v551 = vld [vmem:[#allocation7 + $0x108] sm:$0xff]
    %v552 = vmul.f32 %v550, %v548
    %v553 = vmul.f32 %v551, %v549
    %v554 = vmul.f32 %v552, %v548
    %v555 = vmul.f32 %v553, %v549
    %v556 = vadd.f32 %v452, %v554
    %v557 = vadd.f32 %v453, %v555
    %v558 = vld [vmem:[#allocation12 + $0x100] sm:$0xff]
    %v559 = vld [vmem:[#allocation12 + $0x108] sm:$0xff]
    %v560 = vsub.f32 %v544, %v558
    %v561 = vsub.f32 %v545, %v559
    %v562 = vld [vmem:[#allocation9 + $0x100] sm:$0xff]
    %v563 = vld [vmem:[#allocation9 + $0x108] sm:$0xff]
    %v564 = vmul.f32 %v562, %v560
    %v565 = vmul.f32 %v563, %v561
    %v566 = vmul.f32 %v564, %v560
    %v567 = vmul.f32 %v565, %v561
    %v568 = vadd.f32 %v464, %v566
    %v569 = vadd.f32 %v465, %v567
    %v570 = vld [vmem:[#allocation4 + $0x110] sm:$0xff]
    %v571 = vld [vmem:[#allocation4 + $0x118] sm:$0xff]
    %v572 = vld [vmem:[#allocation10 + $0x110] sm:$0xff]
    %v573 = vld [vmem:[#allocation10 + $0x118] sm:$0xff]
    %v574 = vsub.f32 %v570, %v572
    %v575 = vsub.f32 %v571, %v573
    %v576 = vld [vmem:[#allocation7 + $0x110] sm:$0xff]
    %v577 = vld [vmem:[#allocation7 + $0x118] sm:$0xff]
    %v578 = vmul.f32 %v576, %v574
    %v579 = vmul.f32 %v577, %v575
    %v580 = vmul.f32 %v578, %v574
    %v581 = vmul.f32 %v579, %v575
    %v582 = vadd.f32 %v478, %v580
    %v583 = vadd.f32 %v479, %v581
    %v584 = vld [vmem:[#allocation12 + $0x110] sm:$0xff]
    %v585 = vld [vmem:[#allocation12 + $0x118] sm:$0xff]
    %v586 = vsub.f32 %v570, %v584
    %v587 = vsub.f32 %v571, %v585
    %v588 = vld [vmem:[#allocation9 + $0x110] sm:$0xff]
    %v589 = vld [vmem:[#allocation9 + $0x118] sm:$0xff]
    %v590 = vmul.f32 %v588, %v586
    %v591 = vmul.f32 %v589, %v587
    %v592 = vmul.f32 %v590, %v586
    %v593 = vmul.f32 %v591, %v587
    %v594 = vadd.f32 %v490, %v592
    %v595 = vadd.f32 %v491, %v593
    %v596 = vld [vmem:[#allocation4 + $0x120] sm:$0xff]
    %v597 = vld [vmem:[#allocation4 + $0x128] sm:$0xff]
    %v598 = vld [vmem:[#allocation10 + $0x120] sm:$0xff]
    %v599 = vld [vmem:[#allocation10 + $0x128] sm:$0xff]
    %v600 = vsub.f32 %v596, %v598
    %v601 = vsub.f32 %v597, %v599
    %v602 = vld [vmem:[#allocation7 + $0x120] sm:$0xff]
    %v603 = vld [vmem:[#allocation7 + $0x128] sm:$0xff]
    %v604 = vmul.f32 %v602, %v600
    %v605 = vmul.f32 %v603, %v601
    %v606 = vmul.f32 %v604, %v600
    %v607 = vmul.f32 %v605, %v601
    %v608 = vadd.f32 %v504, %v606
    %v609 = vadd.f32 %v505, %v607
    %v610 = vld [vmem:[#allocation12 + $0x120] sm:$0xff]
    %v611 = vld [vmem:[#allocation12 + $0x128] sm:$0xff]
    %v612 = vsub.f32 %v596, %v610
    %v613 = vsub.f32 %v597, %v611
    %v614 = vld [vmem:[#allocation9 + $0x120] sm:$0xff]
    %v615 = vld [vmem:[#allocation9 + $0x128] sm:$0xff]
    %v616 = vmul.f32 %v614, %v612
    %v617 = vmul.f32 %v615, %v613
    %v618 = vmul.f32 %v616, %v612
    %v619 = vmul.f32 %v617, %v613
    %v620 = vadd.f32 %v516, %v618
    %v621 = vadd.f32 %v517, %v619
    %v622 = vld [vmem:[#allocation4 + $0x130] sm:$0xff]
    %v623 = vld [vmem:[#allocation4 + $0x138] sm:$0xff]
    %v624 = vld [vmem:[#allocation10 + $0x130] sm:$0xff]
    %v625 = vld [vmem:[#allocation10 + $0x138] sm:$0xff]
    %v626 = vsub.f32 %v622, %v624
    %v627 = vsub.f32 %v623, %v625
    %v628 = vld [vmem:[#allocation7 + $0x130] sm:$0xff]
    %v629 = vld [vmem:[#allocation7 + $0x138] sm:$0xff]
    %v630 = vmul.f32 %v628, %v626
    %v631 = vmul.f32 %v629, %v627
    %v632 = vmul.f32 %v630, %v626
    %v633 = vmul.f32 %v631, %v627
    %v634 = vadd.f32 %v530, %v632
    %v635 = vadd.f32 %v531, %v633
    %v636 = vld [vmem:[#allocation12 + $0x130] sm:$0xff]
    %v637 = vld [vmem:[#allocation12 + $0x138] sm:$0xff]
    %v638 = vsub.f32 %v622, %v636
    %v639 = vsub.f32 %v623, %v637
    %v640 = vld [vmem:[#allocation9 + $0x130] sm:$0xff]
    %v641 = vld [vmem:[#allocation9 + $0x138] sm:$0xff]
    %v642 = vmul.f32 %v640, %v638
    %v643 = vmul.f32 %v641, %v639
    %v644 = vmul.f32 %v642, %v638
    %v645 = vmul.f32 %v643, %v639
    %v646 = vadd.f32 %v542, %v644
    %v647 = vadd.f32 %v543, %v645
    %v648 = vld [vmem:[#allocation4 + $0x140] sm:$0xff]
    %v649 = vld [vmem:[#allocation4 + $0x148] sm:$0xff]
    %v650 = vld [vmem:[#allocation10 + $0x140] sm:$0xff]
    %v651 = vld [vmem:[#allocation10 + $0x148] sm:$0xff]
    %v652 = vsub.f32 %v648, %v650
    %v653 = vsub.f32 %v649, %v651
    %v654 = vld [vmem:[#allocation7 + $0x140] sm:$0xff]
    %v655 = vld [vmem:[#allocation7 + $0x148] sm:$0xff]
    %v656 = vmul.f32 %v654, %v652
    %v657 = vmul.f32 %v655, %v653
    %v658 = vmul.f32 %v656, %v652
    %v659 = vmul.f32 %v657, %v653
    %v660 = vadd.f32 %v556, %v658
    %v661 = vadd.f32 %v557, %v659
    %v662 = vld [vmem:[#allocation12 + $0x140] sm:$0xff]
    %v663 = vld [vmem:[#allocation12 + $0x148] sm:$0xff]
    %v664 = vsub.f32 %v648, %v662
    %v665 = vsub.f32 %v649, %v663
    %v666 = vld [vmem:[#allocation9 + $0x140] sm:$0xff]
    %v667 = vld [vmem:[#allocation9 + $0x148] sm:$0xff]
    %v668 = vmul.f32 %v666, %v664
    %v669 = vmul.f32 %v667, %v665
    %v670 = vmul.f32 %v668, %v664
    %v671 = vmul.f32 %v669, %v665
    %v672 = vadd.f32 %v568, %v670
    %v673 = vadd.f32 %v569, %v671
    %v674 = vld [vmem:[#allocation4 + $0x150] sm:$0xff]
    %v675 = vld [vmem:[#allocation4 + $0x158] sm:$0xff]
    %v676 = vld [vmem:[#allocation10 + $0x150] sm:$0xff]
    %v677 = vld [vmem:[#allocation10 + $0x158] sm:$0xff]
    %v678 = vsub.f32 %v674, %v676
    %v679 = vsub.f32 %v675, %v677
    %v680 = vld [vmem:[#allocation7 + $0x150] sm:$0xff]
    %v681 = vld [vmem:[#allocation7 + $0x158] sm:$0xff]
    %v682 = vmul.f32 %v680, %v678
    %v683 = vmul.f32 %v681, %v679
    %v684 = vmul.f32 %v682, %v678
    %v685 = vmul.f32 %v683, %v679
    %v686 = vadd.f32 %v582, %v684
    %v687 = vadd.f32 %v583, %v685
    %v688 = vld [vmem:[#allocation12 + $0x150] sm:$0xff]
    %v689 = vld [vmem:[#allocation12 + $0x158] sm:$0xff]
    %v690 = vsub.f32 %v674, %v688
    %v691 = vsub.f32 %v675, %v689
    %v692 = vld [vmem:[#allocation9 + $0x150] sm:$0xff]
    %v693 = vld [vmem:[#allocation9 + $0x158] sm:$0xff]
    %v694 = vmul.f32 %v692, %v690
    %v695 = vmul.f32 %v693, %v691
    %v696 = vmul.f32 %v694, %v690
    %v697 = vmul.f32 %v695, %v691
    %v698 = vadd.f32 %v594, %v696
    %v699 = vadd.f32 %v595, %v697
    %v700 = vld [vmem:[#allocation4 + $0x160] sm:$0xff]
    %v701 = vld [vmem:[#allocation4 + $0x168] sm:$0xff]
    %v702 = vld [vmem:[#allocation10 + $0x160] sm:$0xff]
    %v703 = vld [vmem:[#allocation10 + $0x168] sm:$0xff]
    %v704 = vsub.f32 %v700, %v702
    %v705 = vsub.f32 %v701, %v703
    %v706 = vld [vmem:[#allocation7 + $0x160] sm:$0xff]
    %v707 = vld [vmem:[#allocation7 + $0x168] sm:$0xff]
    %v708 = vmul.f32 %v706, %v704
    %v709 = vmul.f32 %v707, %v705
    %v710 = vmul.f32 %v708, %v704
    %v711 = vmul.f32 %v709, %v705
    %v712 = vadd.f32 %v608, %v710
    %v713 = vadd.f32 %v609, %v711
    %v714 = vld [vmem:[#allocation12 + $0x160] sm:$0xff]
    %v715 = vld [vmem:[#allocation12 + $0x168] sm:$0xff]
    %v716 = vsub.f32 %v700, %v714
    %v717 = vsub.f32 %v701, %v715
    %v718 = vld [vmem:[#allocation9 + $0x160] sm:$0xff]
    %v719 = vld [vmem:[#allocation9 + $0x168] sm:$0xff]
    %v720 = vmul.f32 %v718, %v716
    %v721 = vmul.f32 %v719, %v717
    %v722 = vmul.f32 %v720, %v716
    %v723 = vmul.f32 %v721, %v717
    %v724 = vadd.f32 %v620, %v722
    %v725 = vadd.f32 %v621, %v723
    %v726 = vld [vmem:[#allocation4 + $0x170] sm:$0xff]
    %v727 = vld [vmem:[#allocation4 + $0x178] sm:$0xff]
    %v728 = vld [vmem:[#allocation10 + $0x170] sm:$0xff]
    %v729 = vld [vmem:[#allocation10 + $0x178] sm:$0xff]
    %v730 = vsub.f32 %v726, %v728
    %v731 = vsub.f32 %v727, %v729
    %v732 = vld [vmem:[#allocation7 + $0x170] sm:$0xff]
    %v733 = vld [vmem:[#allocation7 + $0x178] sm:$0xff]
    %v734 = vmul.f32 %v732, %v730
    %v735 = vmul.f32 %v733, %v731
    %v736 = vmul.f32 %v734, %v730
    %v737 = vmul.f32 %v735, %v731
    %v738 = vadd.f32 %v634, %v736
    %v739 = vadd.f32 %v635, %v737
    %v740 = vld [vmem:[#allocation12 + $0x170] sm:$0xff]
    %v741 = vld [vmem:[#allocation12 + $0x178] sm:$0xff]
    %v742 = vsub.f32 %v726, %v740
    %v743 = vsub.f32 %v727, %v741
    %v744 = vld [vmem:[#allocation9 + $0x170] sm:$0xff]
    %v745 = vld [vmem:[#allocation9 + $0x178] sm:$0xff]
    %v746 = vmul.f32 %v744, %v742
    %v747 = vmul.f32 %v745, %v743
    %v748 = vmul.f32 %v746, %v742
    %v749 = vmul.f32 %v747, %v743
    %v750 = vadd.f32 %v646, %v748
    %v751 = vadd.f32 %v647, %v749
    %v752 = vld [vmem:[#allocation4 + $0x180] sm:$0xff]
    %v753 = vld [vmem:[#allocation4 + $0x188] sm:$0xff]
    %v754 = vld [vmem:[#allocation10 + $0x180] sm:$0xff]
    %v755 = vld [vmem:[#allocation10 + $0x188] sm:$0xff]
    %v756 = vsub.f32 %v752, %v754
    %v757 = vsub.f32 %v753, %v755
    %v758 = vld [vmem:[#allocation7 + $0x180] sm:$0xff]
    %v759 = vld [vmem:[#allocation7 + $0x188] sm:$0xff]
    %v760 = vmul.f32 %v758, %v756
    %v761 = vmul.f32 %v759, %v757
    %v762 = vmul.f32 %v760, %v756
    %v763 = vmul.f32 %v761, %v757
    %v764 = vadd.f32 %v660, %v762
    %v765 = vadd.f32 %v661, %v763
    %v766 = vld [vmem:[#allocation12 + $0x180] sm:$0xff]
    %v767 = vld [vmem:[#allocation12 + $0x188] sm:$0xff]
    %v768 = vsub.f32 %v752, %v766
    %v769 = vsub.f32 %v753, %v767
    %v770 = vld [vmem:[#allocation9 + $0x180] sm:$0xff]
    %v771 = vld [vmem:[#allocation9 + $0x188] sm:$0xff]
    %v772 = vmul.f32 %v770, %v768
    %v773 = vmul.f32 %v771, %v769
    %v774 = vmul.f32 %v772, %v768
    %v775 = vmul.f32 %v773, %v769
    %v776 = vadd.f32 %v672, %v774
    %v777 = vadd.f32 %v673, %v775
    %v778 = vld [vmem:[#allocation4 + $0x190] sm:$0xff]
    %v779 = vld [vmem:[#allocation4 + $0x198] sm:$0xff]
    %v780 = vld [vmem:[#allocation10 + $0x190] sm:$0xff]
    %v781 = vld [vmem:[#allocation10 + $0x198] sm:$0xff]
    %v782 = vsub.f32 %v778, %v780
    %v783 = vsub.f32 %v779, %v781
    %v784 = vld [vmem:[#allocation7 + $0x190] sm:$0xff]
    %v785 = vld [vmem:[#allocation7 + $0x198] sm:$0xff]
    %v786 = vmul.f32 %v784, %v782
    %v787 = vmul.f32 %v785, %v783
    %v788 = vmul.f32 %v786, %v782
    %v789 = vmul.f32 %v787, %v783
    %v790 = vadd.f32 %v686, %v788
    %v791 = vadd.f32 %v687, %v789
    %v792 = vld [vmem:[#allocation12 + $0x190] sm:$0xff]
    %v793 = vld [vmem:[#allocation12 + $0x198] sm:$0xff]
    %v794 = vsub.f32 %v778, %v792
    %v795 = vsub.f32 %v779, %v793
    %v796 = vld [vmem:[#allocation9 + $0x190] sm:$0xff]
    %v797 = vld [vmem:[#allocation9 + $0x198] sm:$0xff]
    %v798 = vmul.f32 %v796, %v794
    %v799 = vmul.f32 %v797, %v795
    %v800 = vmul.f32 %v798, %v794
    %v801 = vmul.f32 %v799, %v795
    %v802 = vadd.f32 %v698, %v800
    %v803 = vadd.f32 %v699, %v801
    %v804 = vld [vmem:[#allocation4 + $0x1a0] sm:$0xff]
    %v805 = vld [vmem:[#allocation4 + $0x1a8] sm:$0xff]
    %v806 = vld [vmem:[#allocation10 + $0x1a0] sm:$0xff]
    %v807 = vld [vmem:[#allocation10 + $0x1a8] sm:$0xff]
    %v808 = vsub.f32 %v804, %v806
    %v809 = vsub.f32 %v805, %v807
    %v810 = vld [vmem:[#allocation7 + $0x1a0] sm:$0xff]
    %v811 = vld [vmem:[#allocation7 + $0x1a8] sm:$0xff]
    %v812 = vmul.f32 %v810, %v808
    %v813 = vmul.f32 %v811, %v809
    %v814 = vmul.f32 %v812, %v808
    %v815 = vmul.f32 %v813, %v809
    %v816 = vadd.f32 %v712, %v814
    %v817 = vadd.f32 %v713, %v815
    %v818 = vld [vmem:[#allocation12 + $0x1a0] sm:$0xff]
    %v819 = vld [vmem:[#allocation12 + $0x1a8] sm:$0xff]
    %v820 = vsub.f32 %v804, %v818
    %v821 = vsub.f32 %v805, %v819
    %v822 = vld [vmem:[#allocation9 + $0x1a0] sm:$0xff]
    %v823 = vld [vmem:[#allocation9 + $0x1a8] sm:$0xff]
    %v824 = vmul.f32 %v822, %v820
    %v825 = vmul.f32 %v823, %v821
    %v826 = vmul.f32 %v824, %v820
    %v827 = vmul.f32 %v825, %v821
    %v828 = vadd.f32 %v724, %v826
    %v829 = vadd.f32 %v725, %v827
    %v830 = vld [vmem:[#allocation4 + $0x1b0] sm:$0xff]
    %v831 = vld [vmem:[#allocation4 + $0x1b8] sm:$0xff]
    %v832 = vld [vmem:[#allocation10 + $0x1b0] sm:$0xff]
    %v833 = vld [vmem:[#allocation10 + $0x1b8] sm:$0xff]
    %v834 = vsub.f32 %v830, %v832
    %v835 = vsub.f32 %v831, %v833
    %v836 = vld [vmem:[#allocation7 + $0x1b0] sm:$0xff]
    %v837 = vld [vmem:[#allocation7 + $0x1b8] sm:$0xff]
    %v838 = vmul.f32 %v836, %v834
    %v839 = vmul.f32 %v837, %v835
    %v840 = vmul.f32 %v838, %v834
    %v841 = vmul.f32 %v839, %v835
    %v842 = vadd.f32 %v738, %v840
    %v843 = vadd.f32 %v739, %v841
    %v844 = vld [vmem:[#allocation12 + $0x1b0] sm:$0xff]
    %v845 = vld [vmem:[#allocation12 + $0x1b8] sm:$0xff]
    %v846 = vsub.f32 %v830, %v844
    %v847 = vsub.f32 %v831, %v845
    %v848 = vld [vmem:[#allocation9 + $0x1b0] sm:$0xff]
    %v849 = vld [vmem:[#allocation9 + $0x1b8] sm:$0xff]
    %v850 = vmul.f32 %v848, %v846
    %v851 = vmul.f32 %v849, %v847
    %v852 = vmul.f32 %v850, %v846
    %v853 = vmul.f32 %v851, %v847
    %v854 = vadd.f32 %v750, %v852
    %v855 = vadd.f32 %v751, %v853
    %v856 = vld [vmem:[#allocation4 + $0x1c0] sm:$0xff]
    %v857 = vld [vmem:[#allocation4 + $0x1c8] sm:$0xff]
    %v858 = vld [vmem:[#allocation10 + $0x1c0] sm:$0xff]
    %v859 = vld [vmem:[#allocation10 + $0x1c8] sm:$0xff]
    %v860 = vsub.f32 %v856, %v858
    %v861 = vsub.f32 %v857, %v859
    %v862 = vld [vmem:[#allocation7 + $0x1c0] sm:$0xff]
    %v863 = vld [vmem:[#allocation7 + $0x1c8] sm:$0xff]
    %v864 = vmul.f32 %v862, %v860
    %v865 = vmul.f32 %v863, %v861
    %v866 = vmul.f32 %v864, %v860
    %v867 = vmul.f32 %v865, %v861
    %v868 = vadd.f32 %v764, %v866
    %v869 = vadd.f32 %v765, %v867
    %v870 = vld [vmem:[#allocation12 + $0x1c0] sm:$0xff]
    %v871 = vld [vmem:[#allocation12 + $0x1c8] sm:$0xff]
    %v872 = vsub.f32 %v856, %v870
    %v873 = vsub.f32 %v857, %v871
    %v874 = vld [vmem:[#allocation9 + $0x1c0] sm:$0xff]
    %v875 = vld [vmem:[#allocation9 + $0x1c8] sm:$0xff]
    %v876 = vmul.f32 %v874, %v872
    %v877 = vmul.f32 %v875, %v873
    %v878 = vmul.f32 %v876, %v872
    %v879 = vmul.f32 %v877, %v873
    %v880 = vadd.f32 %v776, %v878
    %v881 = vadd.f32 %v777, %v879
    %v882 = vld [vmem:[#allocation4 + $0x1d0] sm:$0xff]
    %v883 = vld [vmem:[#allocation4 + $0x1d8] sm:$0xff]
    %v884 = vld [vmem:[#allocation10 + $0x1d0] sm:$0xff]
    %v885 = vld [vmem:[#allocation10 + $0x1d8] sm:$0xff]
    %v886 = vsub.f32 %v882, %v884
    %v887 = vsub.f32 %v883, %v885
    %v888 = vld [vmem:[#allocation7 + $0x1d0] sm:$0xff]
    %v889 = vld [vmem:[#allocation7 + $0x1d8] sm:$0xff]
    %v890 = vmul.f32 %v888, %v886
    %v891 = vmul.f32 %v889, %v887
    %v892 = vmul.f32 %v890, %v886
    %v893 = vmul.f32 %v891, %v887
    %v894 = vadd.f32 %v790, %v892
    %v895 = vadd.f32 %v791, %v893
    %v896 = vld [vmem:[#allocation12 + $0x1d0] sm:$0xff]
    %v897 = vld [vmem:[#allocation12 + $0x1d8] sm:$0xff]
    %v898 = vsub.f32 %v882, %v896
    %v899 = vsub.f32 %v883, %v897
    %v900 = vld [vmem:[#allocation9 + $0x1d0] sm:$0xff]
    %v901 = vld [vmem:[#allocation9 + $0x1d8] sm:$0xff]
    %v902 = vmul.f32 %v900, %v898
    %v903 = vmul.f32 %v901, %v899
    %v904 = vmul.f32 %v902, %v898
    %v905 = vmul.f32 %v903, %v899
    %v906 = vadd.f32 %v802, %v904
    %v907 = vadd.f32 %v803, %v905
    %v908 = vld [vmem:[#allocation4 + $0x1e0] sm:$0xff]
    %v909 = vld [vmem:[#allocation4 + $0x1e8] sm:$0xff]
    %v910 = vld [vmem:[#allocation10 + $0x1e0] sm:$0xff]
    %v911 = vld [vmem:[#allocation10 + $0x1e8] sm:$0xff]
    %v912 = vsub.f32 %v908, %v910
    %v913 = vsub.f32 %v909, %v911
    %v914 = vld [vmem:[#allocation7 + $0x1e0] sm:$0xff]
    %v915 = vld [vmem:[#allocation7 + $0x1e8] sm:$0xff]
    %v916 = vmul.f32 %v914, %v912
    %v917 = vmul.f32 %v915, %v913
    %v918 = vmul.f32 %v916, %v912
    %v919 = vmul.f32 %v917, %v913
    %v920 = vadd.f32 %v816, %v918
    %v921 = vadd.f32 %v817, %v919
    %v922 = vld [vmem:[#allocation12 + $0x1e0] sm:$0xff]
    %v923 = vld [vmem:[#allocation12 + $0x1e8] sm:$0xff]
    %v924 = vsub.f32 %v908, %v922
    %v925 = vsub.f32 %v909, %v923
    %v926 = vld [vmem:[#allocation9 + $0x1e0] sm:$0xff]
    %v927 = vld [vmem:[#allocation9 + $0x1e8] sm:$0xff]
    %v928 = vmul.f32 %v926, %v924
    %v929 = vmul.f32 %v927, %v925
    %v930 = vmul.f32 %v928, %v924
    %v931 = vmul.f32 %v929, %v925
    %v932 = vadd.f32 %v828, %v930
    %v933 = vadd.f32 %v829, %v931
    %v934 = vld [vmem:[#allocation4 + $0x1f0] sm:$0xff]
    %v935 = vld [vmem:[#allocation4 + $0x1f8] sm:$0xff]
    %v936 = vld [vmem:[#allocation10 + $0x1f0] sm:$0xff]
    %v937 = vld [vmem:[#allocation10 + $0x1f8] sm:$0xff]
    %v938 = vsub.f32 %v934, %v936
    %v939 = vsub.f32 %v935, %v937
    %v940 = vld [vmem:[#allocation7 + $0x1f0] sm:$0xff]
    %v941 = vld [vmem:[#allocation7 + $0x1f8] sm:$0xff]
    %v942 = vmul.f32 %v940, %v938
    %v943 = vmul.f32 %v941, %v939
    %v944 = vmul.f32 %v942, %v938
    %v945 = vmul.f32 %v943, %v939
    %v946 = vadd.f32 %v842, %v944
    %v947 = vadd.f32 %v843, %v945
    %v948 = vld [vmem:[#allocation12 + $0x1f0] sm:$0xff]
    %v949 = vld [vmem:[#allocation12 + $0x1f8] sm:$0xff]
    %v950 = vsub.f32 %v934, %v948
    %v951 = vsub.f32 %v935, %v949
    %v952 = vld [vmem:[#allocation9 + $0x1f0] sm:$0xff]
    %v953 = vld [vmem:[#allocation9 + $0x1f8] sm:$0xff]
    %v954 = vmul.f32 %v952, %v950
    %v955 = vmul.f32 %v953, %v951
    %v956 = vmul.f32 %v954, %v950
    %v957 = vmul.f32 %v955, %v951
    %v958 = vadd.f32 %v854, %v956
    %v959 = vadd.f32 %v855, %v957
    %960 = vst [vmem:[#allocation2] sm:$0xff] %v868
    %961 = vst [vmem:[#allocation2 + $0x8] sm:$0xff] %v869
    %962 = vst [vmem:[#allocation2 + $0x10] sm:$0xff] %v894
    %963 = vst [vmem:[#allocation2 + $0x18] sm:$0xff] %v895
    %964 = vst [vmem:[#allocation2 + $0x20] sm:$0xff] %v920
    %965 = vst [vmem:[#allocation2 + $0x28] sm:$0xff] %v921
    %966 = vst [vmem:[#allocation2 + $0x30] sm:$0xff] %v946
    %967 = vst [vmem:[#allocation2 + $0x38] sm:$0xff] %v947
    %968 = vst [vmem:[#allocation3] sm:$0xff] %v880
    %969 = vst [vmem:[#allocation3 + $0x8] sm:$0xff] %v881
    %970 = vst [vmem:[#allocation3 + $0x10] sm:$0xff] %v906
    %971 = vst [vmem:[#allocation3 + $0x18] sm:$0xff] %v907
    %972 = vst [vmem:[#allocation3 + $0x20] sm:$0xff] %v932
    %973 = vst [vmem:[#allocation3 + $0x28] sm:$0xff] %v933
    %974 = vst [vmem:[#allocation3 + $0x30] sm:$0xff] %v958
    %975 = vst [vmem:[#allocation3 + $0x38] sm:$0xff] %v959
    // Predicated region
    $region46: #{_weighted_sq_diff_sums.1} parent=1 // pred_check
      %p976 = pneg %p92
    $region47: #{_weighted_sq_diff_sums.1} parent=1 // pred_check_branch
      %978 = sbr.rel (%p976) target = $region49
    $region48: #{_weighted_sq_diff_sums.1} parent=1 // pred_region
      %v979 = vadd.f32 %v868, %v894
      %v980 = vadd.f32 %v869, %v895
      %v981 = vadd.f32 %v979, %v920
      %v982 = vadd.f32 %v980, %v921
      %v983 = vadd.f32 %v981, %v946
      %v984 = vadd.f32 %v982, %v947
      %v985 = vadd.f32 %v983, %v984
      %986 = vadd.xlane.f32.xlu0 %v985
      %v987 = vpop.xlane.xlu0 %986
      %v988 = vrot.slane %v987, 4
      %v989 = vadd.f32 %v987, %v988
      %v990 = vrot.slane %v989, 2
      %v991 = vadd.f32 %v989, %v990
      %v992 = vrot.slane %v991, 1
      %v993 = vadd.f32 %v991, %v992
      %s994 = vtos %v993
      %s995 = scalar_lea.smem [#allocation13], 0
      %996 = sst [smem:[%s995]] %s994
      %v997 = vadd.f32 %v880, %v906
      %v998 = vadd.f32 %v881, %v907
      %v999 = vadd.f32 %v997, %v932
      %v1000 = vadd.f32 %v998, %v933
      %v1001 = vadd.f32 %v999, %v958
      %v1002 = vadd.f32 %v1000, %v959
      %v1003 = vadd.f32 %v1001, %v1002
      %1004 = vadd.xlane.f32.xlu0 %v1003
      %v1005 = vpop.xlane.xlu0 %1004
      %v1006 = vrot.slane %v1005, 4
      %v1007 = vadd.f32 %v1005, %v1006
      %v1008 = vrot.slane %v1007, 2
      %v1009 = vadd.f32 %v1007, %v1008
      %v1010 = vrot.slane %v1009, 1
      %v1011 = vadd.f32 %v1009, %v1010
      %s1012 = vtos %v1011
      %s1013 = scalar_lea.smem [#allocation14], 0
      %1014 = sst [smem:[%s1013]] %s1012
    $region49: #{_weighted_sq_diff_sums.1} parent=1 // pred_fallthru
      _
    // Predicated region
    $region50: #{_weighted_sq_diff_sums.1} parent=1 // pred_check
      _
    $region51: #{_weighted_sq_diff_sums.1} parent=1 // pred_check_branch
      %1016 = sbr.rel (0) target = $region53
    $region52: #{_weighted_sq_diff_sums.1} parent=1 // pred_region
      %s1018 = ssub.s32 16, 16
      %1019 = vsyncadd [#allocation6], %s1018
      %1022 = dma.smem_to_hbm [#allocation13], 16, %s5, [#allocation6]
    $region53: #{_weighted_sq_diff_sums.1} parent=1 // pred_fallthru
      _
    // Predicated region
    $region54: #{_weighted_sq_diff_sums.1} parent=1 // pred_check
      _
    $region55: #{_weighted_sq_diff_sums.1} parent=1 // pred_check_branch
      %1024 = sbr.rel (0) target = $region57
    $region56: #{_weighted_sq_diff_sums.1} parent=1 // pred_region
      %s1026 = ssub.s32 16, 16
      %1027 = vsyncadd [#allocation15], %s1026
      %1030 = dma.smem_to_hbm [#allocation14], 16, %s6, [#allocation15]
    $region57: #{_weighted_sq_diff_sums.1} parent=1 // pred_fallthru
      _
    // Predicated region
    $region58: #{_weighted_sq_diff_sums.1} parent=1 // pred_check
      _
    $region59: #{_weighted_sq_diff_sums.1} parent=1 // pred_check_branch
      %1032 = sbr.rel (0) target = $region61
    $region60: #{_weighted_sq_diff_sums.1} parent=1 // pred_region
      %1033 = dma.done [#allocation6], 16
    $region61: #{_weighted_sq_diff_sums.1} parent=1 // pred_fallthru
      _
    // Predicated region
    $region62: #{_weighted_sq_diff_sums.1} parent=1 // pred_check
      _
    $region63: #{_weighted_sq_diff_sums.1} parent=1 // pred_check_branch
      %1035 = sbr.rel (0) target = $region65
    $region64: #{_weighted_sq_diff_sums.1} parent=1 // pred_region
      %1036 = dma.done [#allocation15], 16
    $region65: #{_weighted_sq_diff_sums.1} parent=1 // pred_fallthru
      _
    %1037 = sfence
    %1038 = vsyncpa [#allocation5], 1
    %1039 = vsyncpa [#allocation8], 1
    %1040 = vsyncpa [#allocation11], 1
    %1041 = vsyncpa [#allocation6], 1
    %1042 = vsyncpa [#allocation15], 1

</llo_original>
